<compile_context>
chip_gen: v5e
topology: v5e:2x2
jax: 0.10.0
libtpu: 0.0.40
codegen_flags: <defaults>
</compile_context>

<pallas_src>
import functools

import jax
import jax.numpy as jnp
from jax.experimental import pallas as pl
from jax.experimental.pallas import tpu as pltpu

N_EMBD = 128                      # matches `n_embd = 128` in the PyTorch module
NUM_HEADS = 4
HEAD_SIZE = N_EMBD // NUM_HEADS   # 32
BLOCK_SIZE = 128                  # matches `block_size = 128`
NEG_INF = -1e30                   # finite mask sentinel (avoids -inf -> NaN paths)


def mha_kernel(x_ref, wqkv_ref, wp_ref, bp_ref, bias_ref, out_ref, o_cat_ref,
               *, num_heads, head_size):
    """One grid step: BB batch elements, all heads, causal softmax, out proj."""
    BB, T, C = x_ref.shape
    M = BB * T
    H, hs = num_heads, head_size

    # ---- fused QKV projection: one lane-dense (M, C) x (C, 3C) bf16 matmul ----
    # (attention scale is already folded into the Q columns of wqkv host-side)
    x = x_ref[...].reshape(M, C).astype(jnp.bfloat16)
    qkv = jnp.dot(x, wqkv_ref[...], preferred_element_type=jnp.float32)  # (M, 3C) f32
    qkv = qkv.astype(jnp.bfloat16)          # single down-cast for all of Q, K, V

    # grid-invariant additive causal bias (0 on/below diag, -1e30 above), hoisted
    bias = bias_ref[...].reshape(1, T, T)

    for h in range(H):     # static, small (H=4) loop; o_h live range ends at the scratch store
        q_h = qkv[:, h * hs:(h + 1) * hs].reshape(BB, T, hs)
        k_h = qkv[:, C + h * hs:C + (h + 1) * hs].reshape(BB, T, hs)
        v_h = qkv[:, 2 * C + h * hs:2 * C + (h + 1) * hs].reshape(BB, T, hs)

        # QK^T with no explicit transpose: contract the hs dims directly.
        s = jnp.einsum('bqd,bkd->bqk', q_h, k_h,
                       preferred_element_type=jnp.float32)               # (BB, T, T) f32
        s = s + bias                                                      # causal mask
        s = s - jnp.max(s, axis=-1, keepdims=True)
        e = jnp.exp(s)
        inv = pl.reciprocal(jnp.sum(e, axis=-1, keepdims=True), approx=True)
        p = (e * inv).astype(jnp.bfloat16)                                # softmax probs

        o_h = jnp.einsum('bqk,bkd->bqd', p, v_h,
                         preferred_element_type=jnp.float32)              # (BB, T, hs)

        # Concatenate heads via a lane-slice store into the (M, C) scratch.
        o_cat_ref[:, h * hs:(h + 1) * hs] = o_h.reshape(M, hs).astype(jnp.bfloat16)

    # Single full-depth (K=128) output projection + bias.
    out = jnp.dot(o_cat_ref[...], wp_ref[...],
                  preferred_element_type=jnp.float32)                     # (M, C) f32
    out = out + bp_ref[...]
    out_ref[...] = out.reshape(BB, T, C).astype(out_ref.dtype)


def multi_head_attention(x, wq, wk, wv, wp_t, bp, *, block_b=None, out_dtype=None):
    """x: (B, T, C); wq/wk/wv: (H, C, hs); wp_t: (C, C) == W_proj^T; bp: (1, C)."""
    B, T, C = x.shape
    H, _, hs = wq.shape
    scale = C ** (-0.5)   # NOTE: scaled by n_embd (C), exactly as in the PyTorch source

    # Fuse the per-head Q/K/V weights into a single (C, 3*H*hs) = (C, 3C) matrix,
    # columns laid out as [Q head0..H-1 | K head0..H-1 | V head0..H-1].
    def stack(w):  # (H, C, hs) -> (C, H*hs) with head h at columns [h*hs, (h+1)*hs)
        return jnp.transpose(w, (1, 0, 2)).reshape(C, H * hs)

    # Host-side prep: fold attention scale into Q columns, pre-cast weights to bf16.
    wqkv = jnp.concatenate([stack(wq) * scale, stack(wk), stack(wv)],
                           axis=-1).astype(jnp.bfloat16)                  # (C, 3C) bf16
    wp_bf = wp_t.astype(jnp.bfloat16)                                     # (C, C)  bf16
    bp_f32 = bp.astype(jnp.float32)                                       # (1, C)  f32

    # Grid-invariant additive causal bias.
    causal_bias = jnp.where(jnp.tril(jnp.ones((T, T), dtype=bool)),
                            0.0, NEG_INF).astype(jnp.float32)             # (T, T)  f32

    # Batch block: target ~1024 rows per grid step (M = BB*T), but keep the
    # parallel grid length >= 2 when B >= 2 so both v7x TensorCores get work.
    if block_b is None:
        target = max(1, 1024 // T)
        cap = max(1, min(B, target, B // 2))
        block_b = next(bb for bb in range(cap, 0, -1) if B % bb == 0)
    grid = (B // block_b,)

    out_dtype = x.dtype if out_dtype is None else out_dtype

    kernel = functools.partial(mha_kernel, num_heads=H, head_size=hs)

    return pl.pallas_call(
        kernel,
        out_shape=jax.ShapeDtypeStruct((B, T, C), out_dtype),
        grid=grid,
        in_specs=[
            pl.BlockSpec((block_b, T, C), lambda b: (b, 0, 0)),
            # Weights / bias / mask are grid-invariant (constant index maps -> no re-DMA).
            pl.BlockSpec((C, 3 * C), lambda b: (0, 0)),
            pl.BlockSpec((C, C), lambda b: (0, 0)),
            pl.BlockSpec((1, C), lambda b: (0, 0)),
            pl.BlockSpec((T, T), lambda b: (0, 0)),
        ],
        out_specs=pl.BlockSpec((block_b, T, C), lambda b: (b, 0, 0)),
        scratch_shapes=[pltpu.VMEM((block_b * T, C), jnp.bfloat16)],
        compiler_params=pltpu.CompilerParams(dimension_semantics=("parallel",)),
    )(x, wqkv, wp_bf, bp_f32, causal_bias)


def reference_mha(x, wq, wk, wv, wp_t, bp):
    """Pure-JAX f32 reference mirroring the PyTorch forward (dropout = identity)."""
    B, T, C = x.shape
    scale = C ** (-0.5)
    mask = jnp.tril(jnp.ones((T, T), dtype=bool))
    outs = []
    for h in range(wq.shape[0]):
        q = x @ wq[h]
        k = x @ wk[h]
        v = x @ wv[h]
        wei = (q @ jnp.swapaxes(k, -2, -1)) * scale
        wei = jnp.where(mask[None], wei, -jnp.inf)
        wei = jax.nn.softmax(wei, axis=-1)
        outs.append(wei @ v)
    cat = jnp.concatenate(outs, axis=-1)
    return cat @ wp_t + bp


if __name__ == "__main__":
    B, T, C, H, HS = 2, BLOCK_SIZE, N_EMBD, NUM_HEADS, HEAD_SIZE

    key = jax.random.PRNGKey(0)
    kx, kq, kk, kv, kp, kb = jax.random.split(key, 6)

    x = jax.random.normal(kx, (B, T, C), dtype=jnp.float32)
    # nn.Linear(n_embd, head_size, bias=False) per head: weight (hs, C) -> store W^T (C, hs)
    wq = jax.random.normal(kq, (H, C, HS), dtype=jnp.float32) * 0.05
    wk = jax.random.normal(kk, (H, C, HS), dtype=jnp.float32) * 0.05
    wv = jax.random.normal(kv, (H, C, HS), dtype=jnp.float32) * 0.05
    # nn.Linear(n_embd, n_embd): weight (C, C) -> store W^T (C, C), bias (1, C)
    wp_t = jax.random.normal(kp, (C, C), dtype=jnp.float32) * 0.05
    bp = jax.random.normal(kb, (1, C), dtype=jnp.float32) * 0.05

    out = multi_head_attention(x, wq, wk, wv, wp_t, bp)
    out = jax.block_until_ready(out)

    ref = reference_mha(x, wq, wk, wv, wp_t, bp)
    assert out.shape == (B, T, C)
    # bf16 MXU inputs (f32 accumulation) + approx reciprocal -> loosened tolerance.
    assert jnp.allclose(out, ref, atol=2e-2, rtol=2e-2), "kernel mismatch vs reference"

    print("KERNEL_OK")
</pallas_src>

<mosaic_0001>
module attributes {stable_mosaic.version = 11 : i64} {
  func.func @mha_kernel(%arg0: i32, %arg1: memref<1x128x128xf32, #tpu.memory_space<vmem>>, %arg2: memref<128x384xbf16, #tpu.memory_space<vmem>>, %arg3: memref<128x128xbf16, #tpu.memory_space<vmem>>, %arg4: memref<1x128xf32, #tpu.memory_space<vmem>>, %arg5: memref<128x128xf32, #tpu.memory_space<vmem>>, %arg6: memref<1x128x128xf32, #tpu.memory_space<vmem>>, %arg7: memref<128x128xbf16, #tpu.memory_space<vmem>>) attributes {dimension_semantics = [#tpu.dimension_semantics<parallel>], iteration_bounds = array<i64: 2>, scalar_prefetch = 0 : i64, scratch_operands = 1 : i64, tpu.core_type = #tpu.core_type<tc>, window_params = [{transform_indices = @transform_0, window_bounds = array<i64: 1, 128, 128>}, {pipeline_mode = #tpu.pipeline_mode<synchronous>, transform_indices = @transform_1, window_bounds = array<i64: 128, 384>}, {pipeline_mode = #tpu.pipeline_mode<synchronous>, transform_indices = @transform_2, window_bounds = array<i64: 128, 128>}, {pipeline_mode = #tpu.pipeline_mode<synchronous>, transform_indices = @transform_3, window_bounds = array<i64: 1, 128>}, {pipeline_mode = #tpu.pipeline_mode<synchronous>, transform_indices = @transform_4, window_bounds = array<i64: 128, 128>}, {transform_indices = @transform_5, window_bounds = array<i64: 1, 128, 128>}]} {
    %c0 = arith.constant 0 : index
    %c0_0 = arith.constant 0 : index
    %c0_1 = arith.constant 0 : index
    %0 = vector.load %arg1[%c0, %c0_0, %c0_1] : memref<1x128x128xf32, #tpu.memory_space<vmem>>, vector<1x128x128xf32>
    %1 = vector.shape_cast %0 : vector<1x128x128xf32> to vector<128x128xf32>
    %2 = arith.truncf %1 : vector<128x128xf32> to vector<128x128xbf16>
    %c0_2 = arith.constant 0 : index
    %c0_3 = arith.constant 0 : index
    %3 = vector.load %arg2[%c0_2, %c0_3] : memref<128x384xbf16, #tpu.memory_space<vmem>>, vector<128x384xbf16>
    %cst = arith.constant dense<0.000000e+00> : vector<128x384xf32>
    %4 = tpu.matmul %2, %3, %cst {dimension_numbers = #tpu.dot_dimension_numbers<[1], [0], [0], [1], [0, 0, 1, 1], [], []>} : vector<128x128xbf16>, vector<128x384xbf16>, vector<128x384xf32> -> vector<128x384xf32>
    %5 = arith.truncf %4 : vector<128x384xf32> to vector<128x384xbf16>
    %c0_4 = arith.constant 0 : index
    %c0_5 = arith.constant 0 : index
    %6 = vector.load %arg5[%c0_4, %c0_5] : memref<128x128xf32, #tpu.memory_space<vmem>>, vector<128x128xf32>
    %7 = vector.shape_cast %6 : vector<128x128xf32> to vector<1x128x128xf32>
    %8 = vector.extract_strided_slice %5 {offsets = [0, 0], sizes = [128, 32], strides = [1, 1]} : vector<128x384xbf16> to vector<128x32xbf16>
    %9 = vector.shape_cast %8 : vector<128x32xbf16> to vector<1x128x32xbf16>
    %10 = vector.extract_strided_slice %5 {offsets = [0, 128], sizes = [128, 32], strides = [1, 1]} : vector<128x384xbf16> to vector<128x32xbf16>
    %11 = vector.shape_cast %10 : vector<128x32xbf16> to vector<1x128x32xbf16>
    %12 = vector.extract_strided_slice %5 {offsets = [0, 256], sizes = [128, 32], strides = [1, 1]} : vector<128x384xbf16> to vector<128x32xbf16>
    %13 = vector.shape_cast %12 : vector<128x32xbf16> to vector<1x128x32xbf16>
    "tpu.trace_start"() <{level = 10 : i32, message = "bqd,bkd->bqk"}> : () -> ()
    %cst_6 = arith.constant dense<0.000000e+00> : vector<1x128x128xf32>
    %14 = tpu.matmul %9, %11, %cst_6 {dimension_numbers = #tpu.dot_dimension_numbers<[2], [2], [1], [1], [0, 0, 0, 1, 1, 1], [0], [0]>} : vector<1x128x32xbf16>, vector<1x128x32xbf16>, vector<1x128x128xf32> -> vector<1x128x128xf32>
    "tpu.trace_stop"() : () -> ()
    %15 = arith.addf %14, %7 : vector<1x128x128xf32>
    %cst_7 = arith.constant dense<0xFF800000> : vector<1x128xf32>
    %16 = vector.multi_reduction <maximumf>, %15, %cst_7 [2] : vector<1x128x128xf32> to vector<1x128xf32>
    %17 = vector.shape_cast %16 : vector<1x128xf32> to vector<1x128x1xf32>
    %18 = vector.broadcast %17 : vector<1x128x1xf32> to vector<1x128x128xf32>
    %19 = arith.subf %15, %18 : vector<1x128x128xf32>
    %20 = math.exp %19 : vector<1x128x128xf32>
    %cst_8 = arith.constant dense<0.000000e+00> : vector<1x128xf32>
    %21 = vector.multi_reduction <add>, %20, %cst_8 [2] : vector<1x128x128xf32> to vector<1x128xf32>
    %22 = vector.shape_cast %21 : vector<1x128xf32> to vector<1x128x1xf32>
    %23 = tpu.reciprocal %22 {approx = true} : vector<1x128x1xf32> -> vector<1x128x1xf32>
    %24 = vector.broadcast %23 : vector<1x128x1xf32> to vector<1x128x128xf32>
    %25 = arith.mulf %20, %24 : vector<1x128x128xf32>
    %26 = arith.truncf %25 : vector<1x128x128xf32> to vector<1x128x128xbf16>
    "tpu.trace_start"() <{level = 10 : i32, message = "bqk,bkd->bqd"}> : () -> ()
    %cst_9 = arith.constant dense<0.000000e+00> : vector<1x128x32xf32>
    %27 = tpu.matmul %26, %13, %cst_9 {dimension_numbers = #tpu.dot_dimension_numbers<[2], [1], [1], [2], [0, 0, 0, 1, 1, 2], [0], [0]>} : vector<1x128x128xbf16>, vector<1x128x32xbf16>, vector<1x128x32xf32> -> vector<1x128x32xf32>
    "tpu.trace_stop"() : () -> ()
    %28 = vector.shape_cast %27 : vector<1x128x32xf32> to vector<128x32xf32>
    %29 = arith.truncf %28 : vector<128x32xf32> to vector<128x32xbf16>
    %c0_10 = arith.constant 0 : index
    %c0_11 = arith.constant 0 : index
    %30 = vector.load %arg7[%c0_10, %c0_11] : memref<128x128xbf16, #tpu.memory_space<vmem>>, vector<128x32xbf16>
    tpu.vector_store %arg7[%c0_10, %c0_11], %29 {strides = array<i32>} : memref<128x128xbf16, #tpu.memory_space<vmem>>, vector<128x32xbf16>,
    %31 = vector.extract_strided_slice %5 {offsets = [0, 32], sizes = [128, 32], strides = [1, 1]} : vector<128x384xbf16> to vector<128x32xbf16>
    %32 = vector.shape_cast %31 : vector<128x32xbf16> to vector<1x128x32xbf16>
    %33 = vector.extract_strided_slice %5 {offsets = [0, 160], sizes = [128, 32], strides = [1, 1]} : vector<128x384xbf16> to vector<128x32xbf16>
    %34 = vector.shape_cast %33 : vector<128x32xbf16> to vector<1x128x32xbf16>
    %35 = vector.extract_strided_slice %5 {offsets = [0, 288], sizes = [128, 32], strides = [1, 1]} : vector<128x384xbf16> to vector<128x32xbf16>
    %36 = vector.shape_cast %35 : vector<128x32xbf16> to vector<1x128x32xbf16>
    "tpu.trace_start"() <{level = 10 : i32, message = "bqd,bkd->bqk"}> : () -> ()
    %cst_12 = arith.constant dense<0.000000e+00> : vector<1x128x128xf32>
    %37 = tpu.matmul %32, %34, %cst_12 {dimension_numbers = #tpu.dot_dimension_numbers<[2], [2], [1], [1], [0, 0, 0, 1, 1, 1], [0], [0]>} : vector<1x128x32xbf16>, vector<1x128x32xbf16>, vector<1x128x128xf32> -> vector<1x128x128xf32>
    "tpu.trace_stop"() : () -> ()
    %38 = arith.addf %37, %7 : vector<1x128x128xf32>
    %cst_13 = arith.constant dense<0xFF800000> : vector<1x128xf32>
    %39 = vector.multi_reduction <maximumf>, %38, %cst_13 [2] : vector<1x128x128xf32> to vector<1x128xf32>
    %40 = vector.shape_cast %39 : vector<1x128xf32> to vector<1x128x1xf32>
    %41 = vector.broadcast %40 : vector<1x128x1xf32> to vector<1x128x128xf32>
    %42 = arith.subf %38, %41 : vector<1x128x128xf32>
    %43 = math.exp %42 : vector<1x128x128xf32>
    %cst_14 = arith.constant dense<0.000000e+00> : vector<1x128xf32>
    %44 = vector.multi_reduction <add>, %43, %cst_14 [2] : vector<1x128x128xf32> to vector<1x128xf32>
    %45 = vector.shape_cast %44 : vector<1x128xf32> to vector<1x128x1xf32>
    %46 = tpu.reciprocal %45 {approx = true} : vector<1x128x1xf32> -> vector<1x128x1xf32>
    %47 = vector.broadcast %46 : vector<1x128x1xf32> to vector<1x128x128xf32>
    %48 = arith.mulf %43, %47 : vector<1x128x128xf32>
    %49 = arith.truncf %48 : vector<1x128x128xf32> to vector<1x128x128xbf16>
    "tpu.trace_start"() <{level = 10 : i32, message = "bqk,bkd->bqd"}> : () -> ()
    %cst_15 = arith.constant dense<0.000000e+00> : vector<1x128x32xf32>
    %50 = tpu.matmul %49, %36, %cst_15 {dimension_numbers = #tpu.dot_dimension_numbers<[2], [1], [1], [2], [0, 0, 0, 1, 1, 2], [0], [0]>} : vector<1x128x128xbf16>, vector<1x128x32xbf16>, vector<1x128x32xf32> -> vector<1x128x32xf32>
    "tpu.trace_stop"() : () -> ()
    %51 = vector.shape_cast %50 : vector<1x128x32xf32> to vector<128x32xf32>
    %52 = arith.truncf %51 : vector<128x32xf32> to vector<128x32xbf16>
    %c0_16 = arith.constant 0 : index
    %c32 = arith.constant 32 : index
    %53 = vector.load %arg7[%c0_16, %c32] : memref<128x128xbf16, #tpu.memory_space<vmem>>, vector<128x32xbf16>
    tpu.vector_store %arg7[%c0_16, %c32], %52 {strides = array<i32>} : memref<128x128xbf16, #tpu.memory_space<vmem>>, vector<128x32xbf16>,
    %54 = vector.extract_strided_slice %5 {offsets = [0, 64], sizes = [128, 32], strides = [1, 1]} : vector<128x384xbf16> to vector<128x32xbf16>
    %55 = vector.shape_cast %54 : vector<128x32xbf16> to vector<1x128x32xbf16>
    %56 = vector.extract_strided_slice %5 {offsets = [0, 192], sizes = [128, 32], strides = [1, 1]} : vector<128x384xbf16> to vector<128x32xbf16>
    %57 = vector.shape_cast %56 : vector<128x32xbf16> to vector<1x128x32xbf16>
    %58 = vector.extract_strided_slice %5 {offsets = [0, 320], sizes = [128, 32], strides = [1, 1]} : vector<128x384xbf16> to vector<128x32xbf16>
    %59 = vector.shape_cast %58 : vector<128x32xbf16> to vector<1x128x32xbf16>
    "tpu.trace_start"() <{level = 10 : i32, message = "bqd,bkd->bqk"}> : () -> ()
    %cst_17 = arith.constant dense<0.000000e+00> : vector<1x128x128xf32>
    %60 = tpu.matmul %55, %57, %cst_17 {dimension_numbers = #tpu.dot_dimension_numbers<[2], [2], [1], [1], [0, 0, 0, 1, 1, 1], [0], [0]>} : vector<1x128x32xbf16>, vector<1x128x32xbf16>, vector<1x128x128xf32> -> vector<1x128x128xf32>
    "tpu.trace_stop"() : () -> ()
    %61 = arith.addf %60, %7 : vector<1x128x128xf32>
    %cst_18 = arith.constant dense<0xFF800000> : vector<1x128xf32>
    %62 = vector.multi_reduction <maximumf>, %61, %cst_18 [2] : vector<1x128x128xf32> to vector<1x128xf32>
    %63 = vector.shape_cast %62 : vector<1x128xf32> to vector<1x128x1xf32>
    %64 = vector.broadcast %63 : vector<1x128x1xf32> to vector<1x128x128xf32>
    %65 = arith.subf %61, %64 : vector<1x128x128xf32>
    %66 = math.exp %65 : vector<1x128x128xf32>
    %cst_19 = arith.constant dense<0.000000e+00> : vector<1x128xf32>
    %67 = vector.multi_reduction <add>, %66, %cst_19 [2] : vector<1x128x128xf32> to vector<1x128xf32>
    %68 = vector.shape_cast %67 : vector<1x128xf32> to vector<1x128x1xf32>
    %69 = tpu.reciprocal %68 {approx = true} : vector<1x128x1xf32> -> vector<1x128x1xf32>
    %70 = vector.broadcast %69 : vector<1x128x1xf32> to vector<1x128x128xf32>
    %71 = arith.mulf %66, %70 : vector<1x128x128xf32>
    %72 = arith.truncf %71 : vector<1x128x128xf32> to vector<1x128x128xbf16>
    "tpu.trace_start"() <{level = 10 : i32, message = "bqk,bkd->bqd"}> : () -> ()
    %cst_20 = arith.constant dense<0.000000e+00> : vector<1x128x32xf32>
    %73 = tpu.matmul %72, %59, %cst_20 {dimension_numbers = #tpu.dot_dimension_numbers<[2], [1], [1], [2], [0, 0, 0, 1, 1, 2], [0], [0]>} : vector<1x128x128xbf16>, vector<1x128x32xbf16>, vector<1x128x32xf32> -> vector<1x128x32xf32>
    "tpu.trace_stop"() : () -> ()
    %74 = vector.shape_cast %73 : vector<1x128x32xf32> to vector<128x32xf32>
    %75 = arith.truncf %74 : vector<128x32xf32> to vector<128x32xbf16>
    %c0_21 = arith.constant 0 : index
    %c64 = arith.constant 64 : index
    %76 = vector.load %arg7[%c0_21, %c64] : memref<128x128xbf16, #tpu.memory_space<vmem>>, vector<128x32xbf16>
    tpu.vector_store %arg7[%c0_21, %c64], %75 {strides = array<i32>} : memref<128x128xbf16, #tpu.memory_space<vmem>>, vector<128x32xbf16>,
    %77 = vector.extract_strided_slice %5 {offsets = [0, 96], sizes = [128, 32], strides = [1, 1]} : vector<128x384xbf16> to vector<128x32xbf16>
    %78 = vector.shape_cast %77 : vector<128x32xbf16> to vector<1x128x32xbf16>
    %79 = vector.extract_strided_slice %5 {offsets = [0, 224], sizes = [128, 32], strides = [1, 1]} : vector<128x384xbf16> to vector<128x32xbf16>
    %80 = vector.shape_cast %79 : vector<128x32xbf16> to vector<1x128x32xbf16>
    %81 = vector.extract_strided_slice %5 {offsets = [0, 352], sizes = [128, 32], strides = [1, 1]} : vector<128x384xbf16> to vector<128x32xbf16>
    %82 = vector.shape_cast %81 : vector<128x32xbf16> to vector<1x128x32xbf16>
    "tpu.trace_start"() <{level = 10 : i32, message = "bqd,bkd->bqk"}> : () -> ()
    %cst_22 = arith.constant dense<0.000000e+00> : vector<1x128x128xf32>
    %83 = tpu.matmul %78, %80, %cst_22 {dimension_numbers = #tpu.dot_dimension_numbers<[2], [2], [1], [1], [0, 0, 0, 1, 1, 1], [0], [0]>} : vector<1x128x32xbf16>, vector<1x128x32xbf16>, vector<1x128x128xf32> -> vector<1x128x128xf32>
    "tpu.trace_stop"() : () -> ()
    %84 = arith.addf %83, %7 : vector<1x128x128xf32>
    %cst_23 = arith.constant dense<0xFF800000> : vector<1x128xf32>
    %85 = vector.multi_reduction <maximumf>, %84, %cst_23 [2] : vector<1x128x128xf32> to vector<1x128xf32>
    %86 = vector.shape_cast %85 : vector<1x128xf32> to vector<1x128x1xf32>
    %87 = vector.broadcast %86 : vector<1x128x1xf32> to vector<1x128x128xf32>
    %88 = arith.subf %84, %87 : vector<1x128x128xf32>
    %89 = math.exp %88 : vector<1x128x128xf32>
    %cst_24 = arith.constant dense<0.000000e+00> : vector<1x128xf32>
    %90 = vector.multi_reduction <add>, %89, %cst_24 [2] : vector<1x128x128xf32> to vector<1x128xf32>
    %91 = vector.shape_cast %90 : vector<1x128xf32> to vector<1x128x1xf32>
    %92 = tpu.reciprocal %91 {approx = true} : vector<1x128x1xf32> -> vector<1x128x1xf32>
    %93 = vector.broadcast %92 : vector<1x128x1xf32> to vector<1x128x128xf32>
    %94 = arith.mulf %89, %93 : vector<1x128x128xf32>
    %95 = arith.truncf %94 : vector<1x128x128xf32> to vector<1x128x128xbf16>
    "tpu.trace_start"() <{level = 10 : i32, message = "bqk,bkd->bqd"}> : () -> ()
    %cst_25 = arith.constant dense<0.000000e+00> : vector<1x128x32xf32>
    %96 = tpu.matmul %95, %82, %cst_25 {dimension_numbers = #tpu.dot_dimension_numbers<[2], [1], [1], [2], [0, 0, 0, 1, 1, 2], [0], [0]>} : vector<1x128x128xbf16>, vector<1x128x32xbf16>, vector<1x128x32xf32> -> vector<1x128x32xf32>
    "tpu.trace_stop"() : () -> ()
    %97 = vector.shape_cast %96 : vector<1x128x32xf32> to vector<128x32xf32>
    %98 = arith.truncf %97 : vector<128x32xf32> to vector<128x32xbf16>
    %c0_26 = arith.constant 0 : index
    %c96 = arith.constant 96 : index
    %99 = vector.load %arg7[%c0_26, %c96] : memref<128x128xbf16, #tpu.memory_space<vmem>>, vector<128x32xbf16>
    tpu.vector_store %arg7[%c0_26, %c96], %98 {strides = array<i32>} : memref<128x128xbf16, #tpu.memory_space<vmem>>, vector<128x32xbf16>,
    %c0_27 = arith.constant 0 : index
    %c0_28 = arith.constant 0 : index
    %100 = vector.load %arg7[%c0_27, %c0_28] : memref<128x128xbf16, #tpu.memory_space<vmem>>, vector<128x128xbf16>
    %c0_29 = arith.constant 0 : index
    %c0_30 = arith.constant 0 : index
    %101 = vector.load %arg3[%c0_29, %c0_30] : memref<128x128xbf16, #tpu.memory_space<vmem>>, vector<128x128xbf16>
    %cst_31 = arith.constant dense<0.000000e+00> : vector<128x128xf32>
    %102 = tpu.matmul %100, %101, %cst_31 {dimension_numbers = #tpu.dot_dimension_numbers<[1], [0], [0], [1], [0, 0, 1, 1], [], []>} : vector<128x128xbf16>, vector<128x128xbf16>, vector<128x128xf32> -> vector<128x128xf32>
    %c0_32 = arith.constant 0 : index
    %c0_33 = arith.constant 0 : index
    %103 = vector.load %arg4[%c0_32, %c0_33] : memref<1x128xf32, #tpu.memory_space<vmem>>, vector<1x128xf32>
    %104 = vector.broadcast %103 : vector<1x128xf32> to vector<128x128xf32>
    %105 = arith.addf %102, %104 : vector<128x128xf32>
    %106 = vector.shape_cast %105 : vector<128x128xf32> to vector<1x128x128xf32>
    %c0_34 = arith.constant 0 : index
    %c0_35 = arith.constant 0 : index
    %c0_36 = arith.constant 0 : index
    %107 = vector.load %arg6[%c0_34, %c0_35, %c0_36] : memref<1x128x128xf32, #tpu.memory_space<vmem>>, vector<1x128x128xf32>
    tpu.vector_store %arg6[%c0_34, %c0_35, %c0_36], %106 {strides = array<i32>} : memref<1x128x128xf32, #tpu.memory_space<vmem>>, vector<1x128x128xf32>,
    return
  }
  func.func @transform_0(%arg0: i32) -> (i32, i32, i32) {
    %c0_i32 = arith.constant 0 : i32
    %c0_i32_0 = arith.constant 0 : i32
    %c0_i32_1 = arith.constant 0 : i32
    return %arg0, %c0_i32, %c0_i32_0 : i32, i32, i32
  }
  func.func @transform_1(%arg0: i32) -> (i32, i32) {
    %c0_i32 = arith.constant 0 : i32
    %c0_i32_0 = arith.constant 0 : i32
    %c0_i32_1 = arith.constant 0 : i32
    return %c0_i32, %c0_i32_0 : i32, i32
  }
  func.func @transform_2(%arg0: i32) -> (i32, i32) {
    %c0_i32 = arith.constant 0 : i32
    %c0_i32_0 = arith.constant 0 : i32
    %c0_i32_1 = arith.constant 0 : i32
    return %c0_i32, %c0_i32_0 : i32, i32
  }
  func.func @transform_3(%arg0: i32) -> (i32, i32) {
    %c0_i32 = arith.constant 0 : i32
    %c0_i32_0 = arith.constant 0 : i32
    %c0_i32_1 = arith.constant 0 : i32
    return %c0_i32, %c0_i32_0 : i32, i32
  }
  func.func @transform_4(%arg0: i32) -> (i32, i32) {
    %c0_i32 = arith.constant 0 : i32
    %c0_i32_0 = arith.constant 0 : i32
    %c0_i32_1 = arith.constant 0 : i32
    return %c0_i32, %c0_i32_0 : i32, i32
  }
  func.func @transform_5(%arg0: i32) -> (i32, i32, i32) {
    %c0_i32 = arith.constant 0 : i32
    %c0_i32_0 = arith.constant 0 : i32
    %c0_i32_1 = arith.constant 0 : i32
    return %arg0, %c0_i32, %c0_i32_0 : i32, i32, i32
  }
}

</mosaic_0001>

<llo_original>
// kernel: tpu_custom_call.1
$region0: #{tpu_custom_call.1}
  #allocation0 [shape = 'u32[]', space=smem, size = 0x4, offset = 0x4, fixed_abs, tag = 'smem constant byte address 0x4 - core index']
  #allocation1 [shape = 'u32[72,128]{1,0:T(1,128)}', space=vmem, size = 0x9000, scoped, tag = 'internal scratch']
  #allocation2 [shape = 'bf16[128,128]{1,0:T(8,128)(2,1)}', space=vmem, size = 0x8000, scoped, tag = 'scratch operand']
  %s0 = inlined_call_operand.hbm [shape: f32[2,128,128], index: 0, kind: input, shape index: {}]
  %s1 = inlined_call_operand.hbm [shape: bf16[128,384], index: 1, kind: input, shape index: {}]
  %s2 = inlined_call_operand.hbm [shape: bf16[128,128], index: 2, kind: input, shape index: {}]
  %s3 = inlined_call_operand.vmem [shape: f32[1,128], index: 3, kind: input, shape index: {}]
  %s4 = inlined_call_operand.hbm [shape: f32[128,128], index: 4, kind: input, shape index: {}]
  %s5 = inlined_call_operand.hbm [shape: f32[2,128,128], index: 5, kind: output, shape index: {}]
  %s6 = sld [smem:[#allocation0]]
  $region69: #{tpu_custom_call.1} parent=0
    _
  %s8 = ssub.s32 1, %s6
  %s9 = scalar_select 0, %s8, %s6
  $region1: #{tpu_custom_call.1} parent=0
    #allocation3 [shape = 'u8[131072]{0}', space=vmem, size = 0x20000, scoped, tag = 'input window, operand 0']
    #allocation4 [shape = 's32[2]{0}', space=sflag, size = 0x8, scoped, tag = 'scoped memory for tpu_custom_call.1']
    #allocation5 [shape = 's32[2]{0}', space=sflag, size = 0x8, scoped, tag = 'scoped memory for tpu_custom_call.1']
    #allocation6 [shape = 'u8[98304]{0}', space=vmem, size = 0x18000, scoped, tag = 'input window, operand 1, single buffered']
    #allocation7 [shape = 's32[1]{0}', space=sflag, size = 0x4, scoped, tag = 'scoped memory for tpu_custom_call.1']
    #allocation8 [shape = 'u8[32768]{0}', space=vmem, size = 0x8000, scoped, tag = 'input window, operand 2, single buffered']
    #allocation9 [shape = 'u8[65536]{0}', space=vmem, size = 0x10000, scoped, tag = 'input window, operand 4, single buffered']
    #allocation10 [shape = 's32[1]{0}', space=sflag, size = 0x4, scoped, tag = 'scoped memory for tpu_custom_call.1']
    #allocation11 [shape = 'u8[131072]{0}', space=vmem, size = 0x20000, scoped, tag = 'output window, operand 0']
    %10 = vsyncpa [#allocation4], 0
    %s11 = scalar_lea.sflag [#allocation4], 1
    %12 = vsyncpa %s11, 0
    %13 = vsyncpa [#allocation7], 0
    %14 = vsyncpa [#allocation10], 0
    %15 = vsyncpa [#allocation5], 0
    %s16 = scalar_lea.sflag [#allocation5], 1
    %17 = vsyncpa %s16, 0
    loop: start=0, step=1, limit=4
    $region2: #{tpu_custom_call.1} parent=1 // loop_pre_header
      _
    $region3: #{tpu_custom_call.1} parent=1 // loop_header
      %s19 = sphi 0, %s23
      %p20 = scmp.ge.s32.totalorder %s19, 4
      %s29 = sphi 0, %s31
      %s32 = sphi 0, %s29
      %s33 = sphi 0, %s32
      %s49 = sphi 0, %s33
      %s53 = sphi 0, %s53
      %s55 = sphi 0, %s53
      %s56 = sphi 0, %s55
      %s70 = sphi 0, %s56
      %s74 = sphi 0, %s74
      %s76 = sphi 0, %s74
      %s77 = sphi 0, %s76
      %s91 = sphi 0, %s77
      %s95 = sphi 0, %s95
      %s97 = sphi 0, %s95
      %s98 = sphi 0, %s97
      %s112 = sphi 0, %s98
      %s116 = sphi 0, %s116
      %s118 = sphi 0, %s116
      %s119 = sphi 0, %s118
      %s133 = sphi 0, %s119
      %s139 = sphi 0, %s141
      %s142 = sphi 0, %s139
      %s143 = sphi 0, %s142
      %s159 = sphi 0, %s143
    $region4: #{tpu_custom_call.1} parent=1 // loop_header_branch
      %22 = sbr.rel (%p20) target = $region8
    $region5: #{tpu_custom_call.1} parent=1 // loop_body
      %s24 = ssub.s32 %s19, 1
      %s25 = ssub.s32 %s19, 2
      %s26 = sadd.s32 %s19, 1
      %s27 = ssub.s32 %s19, %s26
      %p28 = scmp.eq.s32.totalorder %s27, 0
      %s30 = sadd.s32 %s29, 1
      %s31 = scalar_select %p28, %s29, %s30
      %p34 = pneg %p28
      %p35 = scmp.eq.s32.totalorder %s19, 1
      %p36 = por %p34, %p35
      %p37 = scmp.ne.s32.totalorder %s29, %s32
      %p38 = scmp.eq.s32.totalorder %s19, 0
      %p39 = por %p37, %p38
      %p40 = scmp.ne.s32.totalorder %s29, %s32
      %p41 = scmp.eq.s32.totalorder %s24, 1
      %p42 = por %p40, %p41
      %p43 = scmp.ne.s32.totalorder %s32, %s33
      %p44 = scmp.eq.s32.totalorder %s24, 0
      %p45 = por %p43, %p44
      %p46 = scmp.ne.s32.totalorder %s32, %s33
      %p47 = scmp.eq.s32.totalorder %s25, 1
      %p48 = por %p46, %p47
      %p50 = scmp.ne.s32.totalorder %s33, %s49
      %p51 = scmp.eq.s32.totalorder %s25, 0
      %p52 = por %p50, %p51
      %s54 = sadd.s32 %s53, 1
      %p57 = scmp.eq.s32.totalorder %s19, 1
      %p58 = scmp.ne.s32.totalorder %s53, %s55
      %p59 = scmp.eq.s32.totalorder %s19, 0
      %p60 = por %p58, %p59
      %p61 = scmp.ne.s32.totalorder %s53, %s55
      %p62 = scmp.eq.s32.totalorder %s24, 1
      %p63 = por %p61, %p62
      %p64 = scmp.ne.s32.totalorder %s55, %s56
      %p65 = scmp.eq.s32.totalorder %s24, 0
      %p66 = por %p64, %p65
      %p67 = scmp.ne.s32.totalorder %s55, %s56
      %p68 = scmp.eq.s32.totalorder %s25, 1
      %p69 = por %p67, %p68
      %p71 = scmp.ne.s32.totalorder %s56, %s70
      %p72 = scmp.eq.s32.totalorder %s25, 0
      %p73 = por %p71, %p72
      %s75 = sadd.s32 %s74, 1
      %p78 = scmp.eq.s32.totalorder %s19, 1
      %p79 = scmp.ne.s32.totalorder %s74, %s76
      %p80 = scmp.eq.s32.totalorder %s19, 0
      %p81 = por %p79, %p80
      %p82 = scmp.ne.s32.totalorder %s74, %s76
      %p83 = scmp.eq.s32.totalorder %s24, 1
      %p84 = por %p82, %p83
      %p85 = scmp.ne.s32.totalorder %s76, %s77
      %p86 = scmp.eq.s32.totalorder %s24, 0
      %p87 = por %p85, %p86
      %p88 = scmp.ne.s32.totalorder %s76, %s77
      %p89 = scmp.eq.s32.totalorder %s25, 1
      %p90 = por %p88, %p89
      %p92 = scmp.ne.s32.totalorder %s77, %s91
      %p93 = scmp.eq.s32.totalorder %s25, 0
      %p94 = por %p92, %p93
      %s96 = sadd.s32 %s95, 1
      %p99 = scmp.eq.s32.totalorder %s19, 1
      %p100 = scmp.ne.s32.totalorder %s95, %s97
      %p101 = scmp.eq.s32.totalorder %s19, 0
      %p102 = por %p100, %p101
      %p103 = scmp.ne.s32.totalorder %s95, %s97
      %p104 = scmp.eq.s32.totalorder %s24, 1
      %p105 = por %p103, %p104
      %p106 = scmp.ne.s32.totalorder %s97, %s98
      %p107 = scmp.eq.s32.totalorder %s24, 0
      %p108 = por %p106, %p107
      %p109 = scmp.ne.s32.totalorder %s97, %s98
      %p110 = scmp.eq.s32.totalorder %s25, 1
      %p111 = por %p109, %p110
      %p113 = scmp.ne.s32.totalorder %s98, %s112
      %p114 = scmp.eq.s32.totalorder %s25, 0
      %p115 = por %p113, %p114
      %s117 = sadd.s32 %s116, 1
      %p120 = scmp.eq.s32.totalorder %s19, 1
      %p121 = scmp.ne.s32.totalorder %s116, %s118
      %p122 = scmp.eq.s32.totalorder %s19, 0
      %p123 = por %p121, %p122
      %p124 = scmp.ne.s32.totalorder %s116, %s118
      %p125 = scmp.eq.s32.totalorder %s24, 1
      %p126 = por %p124, %p125
      %p127 = scmp.ne.s32.totalorder %s118, %s119
      %p128 = scmp.eq.s32.totalorder %s24, 0
      %p129 = por %p127, %p128
      %p130 = scmp.ne.s32.totalorder %s118, %s119
      %p131 = scmp.eq.s32.totalorder %s25, 1
      %p132 = por %p130, %p131
      %p134 = scmp.ne.s32.totalorder %s119, %s133
      %p135 = scmp.eq.s32.totalorder %s25, 0
      %p136 = por %p134, %p135
      %s137 = ssub.s32 %s19, %s26
      %p138 = scmp.eq.s32.totalorder %s137, 0
      %s140 = sadd.s32 %s139, 1
      %s141 = scalar_select %p138, %s139, %s140
      %p144 = pneg %p138
      %p145 = scmp.eq.s32.totalorder %s19, 1
      %p146 = por %p144, %p145
      %p147 = scmp.ne.s32.totalorder %s139, %s142
      %p148 = scmp.eq.s32.totalorder %s19, 0
      %p149 = por %p147, %p148
      %p150 = scmp.ne.s32.totalorder %s139, %s142
      %p151 = scmp.eq.s32.totalorder %s24, 1
      %p152 = por %p150, %p151
      %p153 = scmp.ne.s32.totalorder %s142, %s143
      %p154 = scmp.eq.s32.totalorder %s24, 0
      %p155 = por %p153, %p154
      %p156 = scmp.ne.s32.totalorder %s142, %s143
      %p157 = scmp.eq.s32.totalorder %s25, 1
      %p158 = por %p156, %p157
      %p160 = scmp.ne.s32.totalorder %s143, %s159
      %p161 = scmp.eq.s32.totalorder %s25, 0
      %p162 = por %p160, %p161
      %p163 = scmp.le.s32.totalorder 1, %s19
      %p164 = scmp.lt.s32.totalorder %s19, 3
      %p165 = pnand %p163, %p164
      %p166 = pneg %p165
      // Predicated region
      $region9: #{tpu_custom_call.1} parent=5 // pred_check
        _
      $region10: #{tpu_custom_call.1} parent=5 // pred_check_branch
        %168 = sbr.rel (%p165) target = $region12
      $region11: #{tpu_custom_call.1} parent=5 // pred_region
        %s169 = ssub.s32 %s19, 1
        // Predicated region
        $region13: #{tpu_custom_call.1} parent=11 // pred_check
          %p170 = pneg %p66
        $region14: #{tpu_custom_call.1} parent=11 // pred_check_branch
          %172 = sbr.rel (%p170) target = $region16
        $region15: #{tpu_custom_call.1} parent=11 // pred_region
          %174 = vsyncadd [#allocation7], 0
          %s175 = sshll.u32 %s1, 4
          %s176 = int_to_ptr.hbm [resolvable:$true] %s175
          %s177 = sshll.u32 [#allocation6], 4
          %s178 = int_to_ptr.vmem [resolvable:$true] %s177
          %183 = dma.hbm_to_vmem [thread:$0]  %s176, 3072, %s178, [#allocation7], 192, 192, 12
        $region16: #{tpu_custom_call.1} parent=11 // pred_fallthru
          _
        // Predicated region
        $region17: #{tpu_custom_call.1} parent=11 // pred_check
          %p184 = pneg %p87
        $region18: #{tpu_custom_call.1} parent=11 // pred_check_branch
          %186 = sbr.rel (%p184) target = $region20
        $region19: #{tpu_custom_call.1} parent=11 // pred_region
          %188 = vsyncadd [#allocation7], 0
          %s189 = sshll.u32 %s2, 4
          %s190 = int_to_ptr.hbm [resolvable:$true] %s189
          %s191 = sshll.u32 [#allocation8], 4
          %s192 = int_to_ptr.vmem [resolvable:$true] %s191
          %197 = dma.hbm_to_vmem [thread:$0]  %s190, 1024, %s192, [#allocation7], 64, 64, 4
        $region20: #{tpu_custom_call.1} parent=11 // pred_fallthru
          _
        // Predicated region
        $region21: #{tpu_custom_call.1} parent=11 // pred_check
          %p198 = pneg %p108
        $region22: #{tpu_custom_call.1} parent=11 // pred_check_branch
          %200 = sbr.rel (%p198) target = $region24
        $region23: #{tpu_custom_call.1} parent=11 // pred_region
          _
        $region24: #{tpu_custom_call.1} parent=11 // pred_fallthru
          _
        // Predicated region
        $region25: #{tpu_custom_call.1} parent=11 // pred_check
          %p201 = pneg %p129
        $region26: #{tpu_custom_call.1} parent=11 // pred_check_branch
          %203 = sbr.rel (%p201) target = $region28
        $region27: #{tpu_custom_call.1} parent=11 // pred_region
          %205 = vsyncadd [#allocation10], 0
          %s206 = sshll.u32 %s4, 4
          %s207 = int_to_ptr.hbm [resolvable:$true] %s206
          %s208 = sshll.u32 [#allocation9], 4
          %s209 = int_to_ptr.vmem [resolvable:$true] %s208
          %214 = dma.hbm_to_vmem [thread:$0]  %s207, 2048, %s209, [#allocation10], 128, 128, 8
        $region28: #{tpu_custom_call.1} parent=11 // pred_fallthru
          _
      $region12: #{tpu_custom_call.1} parent=5 // pred_fallthru
        _
      %p215 = scmp.lt.s32.totalorder %s19, 2
      // Predicated region
      $region29: #{tpu_custom_call.1} parent=5 // pred_check
        %p216 = pneg %p215
      $region30: #{tpu_custom_call.1} parent=5 // pred_check_branch
        %218 = sbr.rel (%p216) target = $region32
      $region31: #{tpu_custom_call.1} parent=5 // pred_region
        // Predicated region
        $region33: #{tpu_custom_call.1} parent=31 // pred_check
          %p219 = pneg %p39
        $region34: #{tpu_custom_call.1} parent=31 // pred_check_branch
          %221 = sbr.rel (%p219) target = $region36
        $region35: #{tpu_custom_call.1} parent=31 // pred_region
          %s222 = sand.u32 %s29, 1
          %s223 = scalar_lea.sflag [#allocation4], %s222
          %s224 = sand.u32 %s29, 1
          %s225 = smul.addr %s224, 128
          %s226 = scalar_lea.vmem [#allocation3], %s225
          %228 = vsyncadd %s223, 0
          %s229 = smul.addr %s19, 16
          %s230 = smul.addr %s229, 8
          %s231 = scalar_lea.hbm %s0, %s230
          %s232 = sshll.u32 %s231, 4
          %s233 = int_to_ptr.hbm [resolvable:$true] %s232
          %s234 = sshll.u32 %s226, 4
          %s235 = int_to_ptr.vmem [resolvable:$true] %s234
          %240 = dma.hbm_to_vmem [thread:$0]  %s233, 2048, %s235, %s223, 128, 128, 8
        $region36: #{tpu_custom_call.1} parent=31 // pred_fallthru
          _
      $region32: #{tpu_custom_call.1} parent=5 // pred_fallthru
        _
      %p241 = scmp.le.s32.totalorder 1, %s19
      %p242 = scmp.lt.s32.totalorder %s19, 3
      %p243 = pnand %p241, %p242
      %p244 = pneg %p243
      // Predicated region
      $region37: #{tpu_custom_call.1} parent=5 // pred_check
        _
      $region38: #{tpu_custom_call.1} parent=5 // pred_check_branch
        %246 = sbr.rel (%p243) target = $region40
      $region39: #{tpu_custom_call.1} parent=5 // pred_region
        %s247 = ssub.s32 %s19, 1
        %s248 = sand.u32 %s32, 1
        %s249 = scalar_lea.sflag [#allocation4], %s248
        %s250 = sand.u32 %s32, 1
        %s251 = smul.addr %s250, 128
        %s252 = scalar_lea.vmem [#allocation3], %s251
        // Predicated region
        $region41: #{tpu_custom_call.1} parent=39 // pred_check
          %p253 = pneg %p45
        $region42: #{tpu_custom_call.1} parent=39 // pred_check_branch
          %255 = sbr.rel (%p253) target = $region44
        $region43: #{tpu_custom_call.1} parent=39 // pred_region
          %257 = dma.done %s249, 2048
        $region44: #{tpu_custom_call.1} parent=39 // pred_fallthru
          _
        // Predicated region
        $region45: #{tpu_custom_call.1} parent=39 // pred_check
          %p258 = pneg %p66
        $region46: #{tpu_custom_call.1} parent=39 // pred_check_branch
          %260 = sbr.rel (%p258) target = $region48
        $region47: #{tpu_custom_call.1} parent=39 // pred_region
          %262 = dma.done [#allocation7], 3072
        $region48: #{tpu_custom_call.1} parent=39 // pred_fallthru
          _
        // Predicated region
        $region49: #{tpu_custom_call.1} parent=39 // pred_check
          %p263 = pneg %p87
        $region50: #{tpu_custom_call.1} parent=39 // pred_check_branch
          %265 = sbr.rel (%p263) target = $region52
        $region51: #{tpu_custom_call.1} parent=39 // pred_region
          %267 = dma.done [#allocation7], 1024
        $region52: #{tpu_custom_call.1} parent=39 // pred_fallthru
          _
        // Predicated region
        $region53: #{tpu_custom_call.1} parent=39 // pred_check
          %p268 = pneg %p129
        $region54: #{tpu_custom_call.1} parent=39 // pred_check_branch
          %270 = sbr.rel (%p268) target = $region56
        $region55: #{tpu_custom_call.1} parent=39 // pred_region
          %272 = dma.done [#allocation10], 2048
        $region56: #{tpu_custom_call.1} parent=39 // pred_fallthru
          _
        %s273 = sand.u32 %s32, 1
        %s274 = scalar_lea.sflag [#allocation4], %s273
        %s275 = sand.u32 %s32, 1
        %s276 = smul.addr %s275, 128
        %s277 = scalar_lea.vmem [#allocation3], %s276
        %p278 = pneg %p45
        %p279 = pneg %p42
        %p280 = pneg %p66
        %p281 = pneg %p63
        %p282 = pneg %p87
        %p283 = pneg %p84
        %p284 = pneg %p108
        %p285 = pneg %p105
        %p286 = pneg %p129
        %p287 = pneg %p126
        %p288 = pneg %p155
        %p289 = pneg %p152
        %s290 = sand.u32 %s142, 1
        %s291 = scalar_lea.sflag [#allocation5], %s290
        %s292 = sand.u32 %s142, 1
        %s293 = smul.addr %s292, 128
        %s294 = scalar_lea.vmem [#allocation11], %s293
        %v295 = vld [vmem:[%s252] sm:$0xff]
        %v296 = vld [vmem:[%s252 + $0x8] sm:$0xff]
        %v297 = vld [vmem:[%s252 + $0x10] sm:$0xff]
        %v298 = vld [vmem:[%s252 + $0x18] sm:$0xff]
        %v299 = vld [vmem:[%s252 + $0x20] sm:$0xff]
        %v300 = vld [vmem:[%s252 + $0x28] sm:$0xff]
        %v301 = vld [vmem:[%s252 + $0x30] sm:$0xff]
        %v302 = vld [vmem:[%s252 + $0x38] sm:$0xff]
        %v303 = vld [vmem:[%s252 + $0x40] sm:$0xff]
        %v304 = vld [vmem:[%s252 + $0x48] sm:$0xff]
        %v305 = vld [vmem:[%s252 + $0x50] sm:$0xff]
        %v306 = vld [vmem:[%s252 + $0x58] sm:$0xff]
        %v307 = vld [vmem:[%s252 + $0x60] sm:$0xff]
        %v308 = vld [vmem:[%s252 + $0x68] sm:$0xff]
        %v309 = vld [vmem:[%s252 + $0x70] sm:$0xff]
        %v310 = vld [vmem:[%s252 + $0x78] sm:$0xff]
        %v311 = vpack.c.bf16 %v296, %v295
        %v312 = vpack.c.bf16 %v298, %v297
        %v313 = vpack.c.bf16 %v300, %v299
        %v314 = vpack.c.bf16 %v302, %v301
        %v315 = vpack.c.bf16 %v304, %v303
        %v316 = vpack.c.bf16 %v306, %v305
        %v317 = vpack.c.bf16 %v308, %v307
        %v318 = vpack.c.bf16 %v310, %v309
        %v319 = vld [vmem:[#allocation6] sm:$0xff]
        %v320 = vld [vmem:[#allocation6 + $0x8] sm:$0xf]
        %v321 = vld [vmem:[#allocation6 + $0xc] sm:$0xff]
        %v322 = vld [vmem:[#allocation6 + $0x14] sm:$0xf]
        %v323 = vld [vmem:[#allocation6 + $0x18] sm:$0xff]
        %v324 = vld [vmem:[#allocation6 + $0x20] sm:$0xf]
        %v325 = vld [vmem:[#allocation6 + $0x24] sm:$0xff]
        %v326 = vld [vmem:[#allocation6 + $0x2c] sm:$0xf]
        %v327 = vld [vmem:[#allocation6 + $0x30] sm:$0xff]
        %v328 = vld [vmem:[#allocation6 + $0x38] sm:$0xf]
        %v329 = vld [vmem:[#allocation6 + $0x3c] sm:$0xff]
        %v330 = vld [vmem:[#allocation6 + $0x44] sm:$0xf]
        %v331 = vld [vmem:[#allocation6 + $0x48] sm:$0xff]
        %v332 = vld [vmem:[#allocation6 + $0x50] sm:$0xf]
        %v333 = vld [vmem:[#allocation6 + $0x54] sm:$0xff]
        %v334 = vld [vmem:[#allocation6 + $0x5c] sm:$0xf]
        %v335 = vld [vmem:[#allocation6 + $0x60] sm:$0xff]
        %v336 = vld [vmem:[#allocation6 + $0x68] sm:$0xf]
        %v337 = vld [vmem:[#allocation6 + $0x6c] sm:$0xff]
        %v338 = vld [vmem:[#allocation6 + $0x74] sm:$0xf]
        %v339 = vld [vmem:[#allocation6 + $0x78] sm:$0xff]
        %v340 = vld [vmem:[#allocation6 + $0x80] sm:$0xf]
        %v341 = vld [vmem:[#allocation6 + $0x84] sm:$0xff]
        %v342 = vld [vmem:[#allocation6 + $0x8c] sm:$0xf]
        %v343 = vld [vmem:[#allocation6 + $0x90] sm:$0xff]
        %v344 = vld [vmem:[#allocation6 + $0x98] sm:$0xf]
        %v345 = vld [vmem:[#allocation6 + $0x9c] sm:$0xff]
        %v346 = vld [vmem:[#allocation6 + $0xa4] sm:$0xf]
        %v347 = vld [vmem:[#allocation6 + $0xa8] sm:$0xff]
        %v348 = vld [vmem:[#allocation6 + $0xb0] sm:$0xf]
        %v349 = vld [vmem:[#allocation6 + $0xb4] sm:$0xff]
        %v350 = vld [vmem:[#allocation6 + $0xbc] sm:$0xf]
        %v383 = vunpack.c.l.b16 %v319
        %v384 = vunpack.c.h.b16 %v319
        %v385 = vunpack.c.l.b16 %v320
        %v386 = vunpack.c.l.b16 %v321
        %v387 = vunpack.c.h.b16 %v321
        %v388 = vunpack.c.l.b16 %v322
        %v389 = vunpack.c.l.b16 %v323
        %v390 = vunpack.c.h.b16 %v323
        %v391 = vunpack.c.l.b16 %v324
        %v392 = vunpack.c.l.b16 %v325
        %v393 = vunpack.c.h.b16 %v325
        %v394 = vunpack.c.l.b16 %v326
        %v395 = vunpack.c.l.b16 %v327
        %v396 = vunpack.c.h.b16 %v327
        %v397 = vunpack.c.l.b16 %v328
        %v398 = vunpack.c.l.b16 %v329
        %v399 = vunpack.c.h.b16 %v329
        %v400 = vunpack.c.l.b16 %v330
        %v401 = vunpack.c.l.b16 %v331
        %v402 = vunpack.c.h.b16 %v331
        %v403 = vunpack.c.l.b16 %v332
        %v404 = vunpack.c.l.b16 %v333
        %v405 = vunpack.c.h.b16 %v333
        %v406 = vunpack.c.l.b16 %v334
        %v407 = vunpack.c.l.b16 %v335
        %v408 = vunpack.c.h.b16 %v335
        %v409 = vunpack.c.l.b16 %v336
        %v410 = vunpack.c.l.b16 %v337
        %v411 = vunpack.c.h.b16 %v337
        %v412 = vunpack.c.l.b16 %v338
        %v413 = vunpack.c.l.b16 %v339
        %v414 = vunpack.c.h.b16 %v339
        %v415 = vunpack.c.l.b16 %v340
        %v416 = vunpack.c.l.b16 %v341
        %v417 = vunpack.c.h.b16 %v341
        %v418 = vunpack.c.l.b16 %v342
        %v419 = vunpack.c.l.b16 %v343
        %v420 = vunpack.c.h.b16 %v343
        %v421 = vunpack.c.l.b16 %v344
        %v422 = vunpack.c.l.b16 %v345
        %v423 = vunpack.c.h.b16 %v345
        %v424 = vunpack.c.l.b16 %v346
        %v425 = vunpack.c.l.b16 %v347
        %v426 = vunpack.c.h.b16 %v347
        %v427 = vunpack.c.l.b16 %v348
        %v428 = vunpack.c.l.b16 %v349
        %v429 = vunpack.c.h.b16 %v349
        %v430 = vunpack.c.l.b16 %v350
        %v431 = vpack.c.b16 %v386, %v383
        %v432 = vpack.c.b16 %v387, %v384
        %v433 = vpack.c.b16 %v388, %v385
        %v434 = vpack.c.b16 %v392, %v389
        %v435 = vpack.c.b16 %v393, %v390
        %v436 = vpack.c.b16 %v394, %v391
        %v437 = vpack.c.b16 %v398, %v395
        %v438 = vpack.c.b16 %v399, %v396
        %v439 = vpack.c.b16 %v400, %v397
        %v440 = vpack.c.b16 %v404, %v401
        %v441 = vpack.c.b16 %v405, %v402
        %v442 = vpack.c.b16 %v406, %v403
        %v443 = vpack.c.b16 %v410, %v407
        %v444 = vpack.c.b16 %v411, %v408
        %v445 = vpack.c.b16 %v412, %v409
        %v446 = vpack.c.b16 %v416, %v413
        %v447 = vpack.c.b16 %v417, %v414
        %v448 = vpack.c.b16 %v418, %v415
        %v449 = vpack.c.b16 %v422, %v419
        %v450 = vpack.c.b16 %v423, %v420
        %v451 = vpack.c.b16 %v424, %v421
        %v452 = vpack.c.b16 %v428, %v425
        %v453 = vpack.c.b16 %v429, %v426
        %v454 = vpack.c.b16 %v430, %v427
        %479 = vmatpush.bf16.msra.mxu0 %v452
        %480 = vmatpush.bf16.msra.mxu0 %v449
        %481 = vmatpush.bf16.msra.mxu0 %v446
        %482 = vmatpush.bf16.msra.mxu0 %v443
        %483 = vmatpush.bf16.msra.mxu0 %v440
        %484 = vmatpush.bf16.msra.mxu0 %v437
        %485 = vmatpush.bf16.msra.mxu0 %v434
        %486 = vmatpush.bf16.msra.mxu0 %v431
        %487 = vmatmul.bf16.gmra.mxu0 %v311
        %v488 = vpop.f32.mrf.mxu0
        %v489 = vadd.f32 0.0, %v488
        %v490 = vpop.f32.mrf.mxu0
        %v491 = vadd.f32 0.0, %v490
        %492 = vmatmul.bf16.gmra.mxu0 %v312
        %v493 = vpop.f32.mrf.mxu0
        %v494 = vadd.f32 0.0, %v493
        %v495 = vpop.f32.mrf.mxu0
        %v496 = vadd.f32 0.0, %v495
        %497 = vmatmul.bf16.gmra.mxu0 %v313
        %v498 = vpop.f32.mrf.mxu0
        %v499 = vadd.f32 0.0, %v498
        %v500 = vpop.f32.mrf.mxu0
        %v501 = vadd.f32 0.0, %v500
        %502 = vmatmul.bf16.gmra.mxu0 %v314
        %v503 = vpop.f32.mrf.mxu0
        %v504 = vadd.f32 0.0, %v503
        %v505 = vpop.f32.mrf.mxu0
        %v506 = vadd.f32 0.0, %v505
        %507 = vmatmul.bf16.gmra.mxu0 %v315
        %v508 = vpop.f32.mrf.mxu0
        %v509 = vadd.f32 0.0, %v508
        %v510 = vpop.f32.mrf.mxu0
        %v511 = vadd.f32 0.0, %v510
        %512 = vmatmul.bf16.gmra.mxu0 %v316
        %v513 = vpop.f32.mrf.mxu0
        %v514 = vadd.f32 0.0, %v513
        %v515 = vpop.f32.mrf.mxu0
        %v516 = vadd.f32 0.0, %v515
        %517 = vmatmul.bf16.gmra.mxu0 %v317
        %v518 = vpop.f32.mrf.mxu0
        %v519 = vadd.f32 0.0, %v518
        %v520 = vpop.f32.mrf.mxu0
        %v521 = vadd.f32 0.0, %v520
        %522 = vmatmul.bf16.gmra.mxu0 %v318
        %v523 = vpop.f32.mrf.mxu0
        %v524 = vadd.f32 0.0, %v523
        %v525 = vpop.f32.mrf.mxu0
        %v526 = vadd.f32 0.0, %v525
        %527 = vdwg.mxu0
        %528 = vmatpush.bf16.msra.mxu0 %v453
        %529 = vmatpush.bf16.msra.mxu0 %v450
        %530 = vmatpush.bf16.msra.mxu0 %v447
        %531 = vmatpush.bf16.msra.mxu0 %v444
        %532 = vmatpush.bf16.msra.mxu0 %v441
        %533 = vmatpush.bf16.msra.mxu0 %v438
        %534 = vmatpush.bf16.msra.mxu0 %v435
        %535 = vmatpush.bf16.msra.mxu0 %v432
        %536 = vmatmul.bf16.gmra.mxu0 %v311
        %v537 = vpop.f32.mrf.mxu0
        %v538 = vadd.f32 0.0, %v537
        %v539 = vpop.f32.mrf.mxu0
        %v540 = vadd.f32 0.0, %v539
        %541 = vmatmul.bf16.gmra.mxu0 %v312
        %v542 = vpop.f32.mrf.mxu0
        %v543 = vadd.f32 0.0, %v542
        %v544 = vpop.f32.mrf.mxu0
        %v545 = vadd.f32 0.0, %v544
        %546 = vmatmul.bf16.gmra.mxu0 %v313
        %v547 = vpop.f32.mrf.mxu0
        %v548 = vadd.f32 0.0, %v547
        %v549 = vpop.f32.mrf.mxu0
        %v550 = vadd.f32 0.0, %v549
        %551 = vmatmul.bf16.gmra.mxu0 %v314
        %v552 = vpop.f32.mrf.mxu0
        %v553 = vadd.f32 0.0, %v552
        %v554 = vpop.f32.mrf.mxu0
        %v555 = vadd.f32 0.0, %v554
        %556 = vmatmul.bf16.gmra.mxu0 %v315
        %v557 = vpop.f32.mrf.mxu0
        %v558 = vadd.f32 0.0, %v557
        %v559 = vpop.f32.mrf.mxu0
        %v560 = vadd.f32 0.0, %v559
        %561 = vmatmul.bf16.gmra.mxu0 %v316
        %v562 = vpop.f32.mrf.mxu0
        %v563 = vadd.f32 0.0, %v562
        %v564 = vpop.f32.mrf.mxu0
        %v565 = vadd.f32 0.0, %v564
        %566 = vmatmul.bf16.gmra.mxu0 %v317
        %v567 = vpop.f32.mrf.mxu0
        %v568 = vadd.f32 0.0, %v567
        %v569 = vpop.f32.mrf.mxu0
        %v570 = vadd.f32 0.0, %v569
        %571 = vmatmul.bf16.gmra.mxu0 %v318
        %v572 = vpop.f32.mrf.mxu0
        %v573 = vadd.f32 0.0, %v572
        %v574 = vpop.f32.mrf.mxu0
        %v575 = vadd.f32 0.0, %v574
        %576 = vdwg.mxu0
        %577 = vmatpush.bf16.msra.mxu0 %v454
        %578 = vmatpush.bf16.msra.mxu0 %v451
        %579 = vmatpush.bf16.msra.mxu0 %v448
        %580 = vmatpush.bf16.msra.mxu0 %v445
        %581 = vmatpush.bf16.msra.mxu0 %v442
        %582 = vmatpush.bf16.msra.mxu0 %v439
        %583 = vmatpush.bf16.msra.mxu0 %v436
        %584 = vmatpush.bf16.msra.mxu0 %v433
        %585 = vmatmul.bf16.gmra.mxu0 %v311
        %v586 = vpop.f32.mrf.mxu0
        %v587 = vadd.f32 0.0, %v586
        %v588 = vpop.f32.mrf.mxu0
        %v589 = vadd.f32 0.0, %v588
        %590 = vmatmul.bf16.gmra.mxu0 %v312
        %v591 = vpop.f32.mrf.mxu0
        %v592 = vadd.f32 0.0, %v591
        %v593 = vpop.f32.mrf.mxu0
        %v594 = vadd.f32 0.0, %v593
        %595 = vmatmul.bf16.gmra.mxu0 %v313
        %v596 = vpop.f32.mrf.mxu0
        %v597 = vadd.f32 0.0, %v596
        %v598 = vpop.f32.mrf.mxu0
        %v599 = vadd.f32 0.0, %v598
        %600 = vmatmul.bf16.gmra.mxu0 %v314
        %v601 = vpop.f32.mrf.mxu0
        %v602 = vadd.f32 0.0, %v601
        %v603 = vpop.f32.mrf.mxu0
        %v604 = vadd.f32 0.0, %v603
        %605 = vmatmul.bf16.gmra.mxu0 %v315
        %v606 = vpop.f32.mrf.mxu0
        %v607 = vadd.f32 0.0, %v606
        %v608 = vpop.f32.mrf.mxu0
        %v609 = vadd.f32 0.0, %v608
        %610 = vmatmul.bf16.gmra.mxu0 %v316
        %v611 = vpop.f32.mrf.mxu0
        %v612 = vadd.f32 0.0, %v611
        %v613 = vpop.f32.mrf.mxu0
        %v614 = vadd.f32 0.0, %v613
        %615 = vmatmul.bf16.gmra.mxu0 %v317
        %v616 = vpop.f32.mrf.mxu0
        %v617 = vadd.f32 0.0, %v616
        %v618 = vpop.f32.mrf.mxu0
        %v619 = vadd.f32 0.0, %v618
        %620 = vmatmul.bf16.gmra.mxu0 %v318
        %v621 = vpop.f32.mrf.mxu0
        %v622 = vadd.f32 0.0, %v621
        %v623 = vpop.f32.mrf.mxu0
        %v624 = vadd.f32 0.0, %v623
        %625 = vdwg.mxu0
        %v626 = vpack.c.bf16 %v538, %v489
        %v627 = vpack.c.bf16 %v587, %v587
        %v628 = vpack.c.bf16 %v540, %v491
        %v629 = vpack.c.bf16 %v589, %v589
        %v630 = vpack.c.bf16 %v543, %v494
        %v631 = vpack.c.bf16 %v592, %v592
        %v632 = vpack.c.bf16 %v545, %v496
        %v633 = vpack.c.bf16 %v594, %v594
        %v634 = vpack.c.bf16 %v548, %v499
        %v635 = vpack.c.bf16 %v597, %v597
        %v636 = vpack.c.bf16 %v550, %v501
        %v637 = vpack.c.bf16 %v599, %v599
        %v638 = vpack.c.bf16 %v553, %v504
        %v639 = vpack.c.bf16 %v602, %v602
        %v640 = vpack.c.bf16 %v555, %v506
        %v641 = vpack.c.bf16 %v604, %v604
        %v642 = vpack.c.bf16 %v558, %v509
        %v643 = vpack.c.bf16 %v607, %v607
        %v644 = vpack.c.bf16 %v560, %v511
        %v645 = vpack.c.bf16 %v609, %v609
        %v646 = vpack.c.bf16 %v563, %v514
        %v647 = vpack.c.bf16 %v612, %v612
        %v648 = vpack.c.bf16 %v565, %v516
        %v649 = vpack.c.bf16 %v614, %v614
        %v650 = vpack.c.bf16 %v568, %v519
        %v651 = vpack.c.bf16 %v617, %v617
        %v652 = vpack.c.bf16 %v570, %v521
        %v653 = vpack.c.bf16 %v619, %v619
        %v654 = vpack.c.bf16 %v573, %v524
        %v655 = vpack.c.bf16 %v622, %v622
        %v656 = vpack.c.bf16 %v575, %v526
        %v657 = vpack.c.bf16 %v624, %v624
        %v658 = vld [vmem:[#allocation9] sm:$0xff]
        %v659 = vld [vmem:[#allocation9 + $0x8] sm:$0xff]
        %v660 = vld [vmem:[#allocation9 + $0x10] sm:$0xff]
        %v661 = vld [vmem:[#allocation9 + $0x18] sm:$0xff]
        %v662 = vld [vmem:[#allocation9 + $0x20] sm:$0xff]
        %v663 = vld [vmem:[#allocation9 + $0x28] sm:$0xff]
        %v664 = vld [vmem:[#allocation9 + $0x30] sm:$0xff]
        %v665 = vld [vmem:[#allocation9 + $0x38] sm:$0xff]
        %v666 = vld [vmem:[#allocation9 + $0x40] sm:$0xff]
        %v667 = vld [vmem:[#allocation9 + $0x48] sm:$0xff]
        %v668 = vld [vmem:[#allocation9 + $0x50] sm:$0xff]
        %v669 = vld [vmem:[#allocation9 + $0x58] sm:$0xff]
        %v670 = vld [vmem:[#allocation9 + $0x60] sm:$0xff]
        %v671 = vld [vmem:[#allocation9 + $0x68] sm:$0xff]
        %v672 = vld [vmem:[#allocation9 + $0x70] sm:$0xff]
        %v673 = vld [vmem:[#allocation9 + $0x78] sm:$0xff]
        %v690 = vrot.slane %v626, 4
        %v691 = vrot.slane %v628, 4
        %v692 = vrot.slane %v630, 4
        %v693 = vrot.slane %v632, 4
        %v694 = vrot.slane %v634, 4
        %v695 = vrot.slane %v636, 4
        %v696 = vrot.slane %v638, 4
        %v697 = vrot.slane %v640, 4
        %v698 = vrot.slane %v642, 4
        %v699 = vrot.slane %v644, 4
        %v700 = vrot.slane %v646, 4
        %v701 = vrot.slane %v648, 4
        %v702 = vrot.slane %v650, 4
        %v703 = vrot.slane %v652, 4
        %v704 = vrot.slane %v654, 4
        %v705 = vrot.slane %v656, 4
        %v706 = vunpack.c.l.b16 %v626
        %v707 = vunpack.c.l.b16 %v628
        %v708 = vunpack.c.l.b16 %v630
        %v709 = vunpack.c.l.b16 %v632
        %v710 = vunpack.c.l.b16 %v634
        %v711 = vunpack.c.l.b16 %v636
        %v712 = vunpack.c.l.b16 %v638
        %v713 = vunpack.c.l.b16 %v640
        %v714 = vunpack.c.l.b16 %v642
        %v715 = vunpack.c.l.b16 %v644
        %v716 = vunpack.c.l.b16 %v646
        %v717 = vunpack.c.l.b16 %v648
        %v718 = vunpack.c.l.b16 %v650
        %v719 = vunpack.c.l.b16 %v652
        %v720 = vunpack.c.l.b16 %v654
        %v721 = vunpack.c.l.b16 %v656
        %v722 = vpack.c.b16 %v707, %v706
        %v723 = vpack.c.b16 %v709, %v708
        %v724 = vpack.c.b16 %v711, %v710
        %v725 = vpack.c.b16 %v713, %v712
        %v726 = vpack.c.b16 %v715, %v714
        %v727 = vpack.c.b16 %v717, %v716
        %v728 = vpack.c.b16 %v719, %v718
        %v729 = vpack.c.b16 %v721, %v720
        %v730 = vunpack.c.l.b16 %v690
        %v731 = vunpack.c.l.b16 %v691
        %v732 = vunpack.c.l.b16 %v692
        %v733 = vunpack.c.l.b16 %v693
        %v734 = vunpack.c.l.b16 %v694
        %v735 = vunpack.c.l.b16 %v695
        %v736 = vunpack.c.l.b16 %v696
        %v737 = vunpack.c.l.b16 %v697
        %v738 = vunpack.c.l.b16 %v698
        %v739 = vunpack.c.l.b16 %v699
        %v740 = vunpack.c.l.b16 %v700
        %v741 = vunpack.c.l.b16 %v701
        %v742 = vunpack.c.l.b16 %v702
        %v743 = vunpack.c.l.b16 %v703
        %v744 = vunpack.c.l.b16 %v704
        %v745 = vunpack.c.l.b16 %v705
        %v746 = vpack.c.b16 %v731, %v730
        %v747 = vpack.c.b16 %v733, %v732
        %v748 = vpack.c.b16 %v735, %v734
        %v749 = vpack.c.b16 %v737, %v736
        %v750 = vpack.c.b16 %v739, %v738
        %v751 = vpack.c.b16 %v741, %v740
        %v752 = vpack.c.b16 %v743, %v742
        %v753 = vpack.c.b16 %v745, %v744
        %vm754 = vcmask 261120
        %v756 = vsel %vm754, %v722, 0
        %v759 = vsel %vm754, %v723, 0
        %v762 = vsel %vm754, %v724, 0
        %v765 = vsel %vm754, %v725, 0
        %v768 = vsel %vm754, %v726, 0
        %v771 = vsel %vm754, %v727, 0
        %v774 = vsel %vm754, %v728, 0
        %v777 = vsel %vm754, %v729, 0
        %v780 = vsel %vm754, %v746, 0
        %v783 = vsel %vm754, %v747, 0
        %v786 = vsel %vm754, %v748, 0
        %v789 = vsel %vm754, %v749, 0
        %v792 = vsel %vm754, %v750, 0
        %v795 = vsel %vm754, %v751, 0
        %v798 = vsel %vm754, %v752, 0
        %v801 = vsel %vm754, %v753, 0
        %803 = vmatpush.bf16.xpose.msra.mxu0 %v801
        %804 = vmatpush.bf16.xpose.msra.mxu0 %v798
        %805 = vmatpush.bf16.xpose.msra.mxu0 %v795
        %806 = vmatpush.bf16.xpose.msra.mxu0 %v792
        %807 = vmatpush.bf16.xpose.msra.mxu0 %v789
        %808 = vmatpush.bf16.xpose.msra.mxu0 %v786
        %809 = vmatpush.bf16.xpose.msra.mxu0 %v783
        %810 = vmatpush.bf16.xpose.msra.mxu0 %v780
        %811 = vmatmul.bf16.gmra.mxu0 %v756
        %v812 = vpop.f32.mrf.mxu0
        %v813 = vadd.f32 %v658, %v812
        %v814 = vpop.f32.mrf.mxu0
        %v815 = vadd.f32 %v659, %v814
        %816 = vmatmul.bf16.gmra.mxu0 %v759
        %v817 = vpop.f32.mrf.mxu0
        %v818 = vadd.f32 %v660, %v817
        %v819 = vpop.f32.mrf.mxu0
        %v820 = vadd.f32 %v661, %v819
        %821 = vmatmul.bf16.gmra.mxu0 %v762
        %v822 = vpop.f32.mrf.mxu0
        %v823 = vadd.f32 %v662, %v822
        %v824 = vpop.f32.mrf.mxu0
        %v825 = vadd.f32 %v663, %v824
        %826 = vmatmul.bf16.gmra.mxu0 %v765
        %v827 = vpop.f32.mrf.mxu0
        %v828 = vadd.f32 %v664, %v827
        %v829 = vpop.f32.mrf.mxu0
        %v830 = vadd.f32 %v665, %v829
        %831 = vmatmul.bf16.gmra.mxu0 %v768
        %v832 = vpop.f32.mrf.mxu0
        %v833 = vadd.f32 %v666, %v832
        %v834 = vpop.f32.mrf.mxu0
        %v835 = vadd.f32 %v667, %v834
        %836 = vmatmul.bf16.gmra.mxu0 %v771
        %v837 = vpop.f32.mrf.mxu0
        %v838 = vadd.f32 %v668, %v837
        %v839 = vpop.f32.mrf.mxu0
        %v840 = vadd.f32 %v669, %v839
        %841 = vmatmul.bf16.gmra.mxu0 %v774
        %v842 = vpop.f32.mrf.mxu0
        %v843 = vadd.f32 %v670, %v842
        %v844 = vpop.f32.mrf.mxu0
        %v845 = vadd.f32 %v671, %v844
        %846 = vmatmul.bf16.gmra.mxu0 %v777
        %v847 = vpop.f32.mrf.mxu0
        %v848 = vadd.f32 %v672, %v847
        %v849 = vpop.f32.mrf.mxu0
        %v850 = vadd.f32 %v673, %v849
        %851 = vdwg.mxu0
        %852 = vmax.xlane.f32.xlu0 %v813
        %v853 = vpop.xlane.xlu0 %852
        %854 = vmax.xlane.f32.xlu0 %v815
        %v855 = vpop.xlane.xlu0 %854
        %856 = vmax.xlane.f32.xlu0 %v818
        %v857 = vpop.xlane.xlu0 %856
        %858 = vmax.xlane.f32.xlu0 %v820
        %v859 = vpop.xlane.xlu0 %858
        %860 = vmax.xlane.f32.xlu0 %v823
        %v861 = vpop.xlane.xlu0 %860
        %862 = vmax.xlane.f32.xlu0 %v825
        %v863 = vpop.xlane.xlu0 %862
        %864 = vmax.xlane.f32.xlu0 %v828
        %v865 = vpop.xlane.xlu0 %864
        %866 = vmax.xlane.f32.xlu0 %v830
        %v867 = vpop.xlane.xlu0 %866
        %868 = vmax.xlane.f32.xlu0 %v833
        %v869 = vpop.xlane.xlu0 %868
        %870 = vmax.xlane.f32.xlu0 %v835
        %v871 = vpop.xlane.xlu0 %870
        %872 = vmax.xlane.f32.xlu0 %v838
        %v873 = vpop.xlane.xlu0 %872
        %874 = vmax.xlane.f32.xlu0 %v840
        %v875 = vpop.xlane.xlu0 %874
        %876 = vmax.xlane.f32.xlu0 %v843
        %v877 = vpop.xlane.xlu0 %876
        %878 = vmax.xlane.f32.xlu0 %v845
        %v879 = vpop.xlane.xlu0 %878
        %880 = vmax.xlane.f32.xlu0 %v848
        %v881 = vpop.xlane.xlu0 %880
        %882 = vmax.xlane.f32.xlu0 %v850
        %v883 = vpop.xlane.xlu0 %882
        %v884 = vsub.f32 %v813, %v853
        %v885 = vsub.f32 %v815, %v855
        %v886 = vsub.f32 %v818, %v857
        %v887 = vsub.f32 %v820, %v859
        %v888 = vsub.f32 %v823, %v861
        %v889 = vsub.f32 %v825, %v863
        %v890 = vsub.f32 %v828, %v865
        %v891 = vsub.f32 %v830, %v867
        %v892 = vsub.f32 %v833, %v869
        %v893 = vsub.f32 %v835, %v871
        %v894 = vsub.f32 %v838, %v873
        %v895 = vsub.f32 %v840, %v875
        %v896 = vsub.f32 %v843, %v877
        %v897 = vsub.f32 %v845, %v879
        %v898 = vsub.f32 %v848, %v881
        %v899 = vsub.f32 %v850, %v883
        %v900 = vmul.f32 %v884, 1.442695
        %v901 = vpow.pop %v900
        %v902 = vmul.f32 %v885, 1.442695
        %v903 = vpow.pop %v902
        %v904 = vmul.f32 %v886, 1.442695
        %v905 = vpow.pop %v904
        %v906 = vmul.f32 %v887, 1.442695
        %v907 = vpow.pop %v906
        %v908 = vmul.f32 %v888, 1.442695
        %v909 = vpow.pop %v908
        %v910 = vmul.f32 %v889, 1.442695
        %v911 = vpow.pop %v910
        %v912 = vmul.f32 %v890, 1.442695
        %v913 = vpow.pop %v912
        %v914 = vmul.f32 %v891, 1.442695
        %v915 = vpow.pop %v914
        %v916 = vmul.f32 %v892, 1.442695
        %v917 = vpow.pop %v916
        %v918 = vmul.f32 %v893, 1.442695
        %v919 = vpow.pop %v918
        %v920 = vmul.f32 %v894, 1.442695
        %v921 = vpow.pop %v920
        %v922 = vmul.f32 %v895, 1.442695
        %v923 = vpow.pop %v922
        %v924 = vmul.f32 %v896, 1.442695
        %v925 = vpow.pop %v924
        %v926 = vmul.f32 %v897, 1.442695
        %v927 = vpow.pop %v926
        %v928 = vmul.f32 %v898, 1.442695
        %v929 = vpow.pop %v928
        %v930 = vmul.f32 %v899, 1.442695
        %v931 = vpow.pop %v930
        %932 = vadd.xlane.f32.xlu0 %v901
        %v933 = vpop.xlane.xlu0 %932
        %934 = vadd.xlane.f32.xlu0 %v903
        %v935 = vpop.xlane.xlu0 %934
        %936 = vadd.xlane.f32.xlu0 %v905
        %v937 = vpop.xlane.xlu0 %936
        %938 = vadd.xlane.f32.xlu0 %v907
        %v939 = vpop.xlane.xlu0 %938
        %940 = vadd.xlane.f32.xlu0 %v909
        %v941 = vpop.xlane.xlu0 %940
        %942 = vadd.xlane.f32.xlu0 %v911
        %v943 = vpop.xlane.xlu0 %942
        %944 = vadd.xlane.f32.xlu0 %v913
        %v945 = vpop.xlane.xlu0 %944
        %946 = vadd.xlane.f32.xlu0 %v915
        %v947 = vpop.xlane.xlu0 %946
        %948 = vadd.xlane.f32.xlu0 %v917
        %v949 = vpop.xlane.xlu0 %948
        %950 = vadd.xlane.f32.xlu0 %v919
        %v951 = vpop.xlane.xlu0 %950
        %952 = vadd.xlane.f32.xlu0 %v921
        %v953 = vpop.xlane.xlu0 %952
        %954 = vadd.xlane.f32.xlu0 %v923
        %v955 = vpop.xlane.xlu0 %954
        %956 = vadd.xlane.f32.xlu0 %v925
        %v957 = vpop.xlane.xlu0 %956
        %958 = vadd.xlane.f32.xlu0 %v927
        %v959 = vpop.xlane.xlu0 %958
        %960 = vadd.xlane.f32.xlu0 %v929
        %v961 = vpop.xlane.xlu0 %960
        %962 = vadd.xlane.f32.xlu0 %v931
        %v963 = vpop.xlane.xlu0 %962
        %v964 = vrcp.pop %v933
        %v965 = vrcp.pop %v935
        %v966 = vrcp.pop %v937
        %v967 = vrcp.pop %v939
        %v968 = vrcp.pop %v941
        %v969 = vrcp.pop %v943
        %v970 = vrcp.pop %v945
        %v971 = vrcp.pop %v947
        %v972 = vrcp.pop %v949
        %v973 = vrcp.pop %v951
        %v974 = vrcp.pop %v953
        %v975 = vrcp.pop %v955
        %v976 = vrcp.pop %v957
        %v977 = vrcp.pop %v959
        %v978 = vrcp.pop %v961
        %v979 = vrcp.pop %v963
        %v980 = vmul.f32 %v901, %v964
        %v981 = vmul.f32 %v903, %v965
        %v982 = vmul.f32 %v905, %v966
        %v983 = vmul.f32 %v907, %v967
        %v984 = vmul.f32 %v909, %v968
        %v985 = vmul.f32 %v911, %v969
        %v986 = vmul.f32 %v913, %v970
        %v987 = vmul.f32 %v915, %v971
        %v988 = vmul.f32 %v917, %v972
        %v989 = vmul.f32 %v919, %v973
        %v990 = vmul.f32 %v921, %v974
        %v991 = vmul.f32 %v923, %v975
        %v992 = vmul.f32 %v925, %v976
        %v993 = vmul.f32 %v927, %v977
        %v994 = vmul.f32 %v929, %v978
        %v995 = vmul.f32 %v931, %v979
        %v996 = vpack.c.bf16 %v980, %v980
        %v997 = vpack.c.bf16 %v981, %v981
        %v998 = vpack.c.bf16 %v982, %v982
        %v999 = vpack.c.bf16 %v983, %v983
        %v1000 = vpack.c.bf16 %v984, %v984
        %v1001 = vpack.c.bf16 %v985, %v985
        %v1002 = vpack.c.bf16 %v986, %v986
        %v1003 = vpack.c.bf16 %v987, %v987
        %v1004 = vpack.c.bf16 %v988, %v988
        %v1005 = vpack.c.bf16 %v989, %v989
        %v1006 = vpack.c.bf16 %v990, %v990
        %v1007 = vpack.c.bf16 %v991, %v991
        %v1008 = vpack.c.bf16 %v992, %v992
        %v1009 = vpack.c.bf16 %v993, %v993
        %v1010 = vpack.c.bf16 %v994, %v994
        %v1011 = vpack.c.bf16 %v995, %v995
        %v1028 = vunpack.c.l.b16 %v996
        %v1029 = vunpack.c.l.b16 %v997
        %v1030 = vunpack.c.l.b16 %v998
        %v1031 = vunpack.c.l.b16 %v999
        %v1032 = vunpack.c.l.b16 %v1000
        %v1033 = vunpack.c.l.b16 %v1001
        %v1034 = vunpack.c.l.b16 %v1002
        %v1035 = vunpack.c.l.b16 %v1003
        %v1036 = vunpack.c.l.b16 %v1004
        %v1037 = vunpack.c.l.b16 %v1005
        %v1038 = vunpack.c.l.b16 %v1006
        %v1039 = vunpack.c.l.b16 %v1007
        %v1040 = vunpack.c.l.b16 %v1008
        %v1041 = vunpack.c.l.b16 %v1009
        %v1042 = vunpack.c.l.b16 %v1010
        %v1043 = vunpack.c.l.b16 %v1011
        %v1044 = vpack.c.b16 %v1029, %v1028
        %v1045 = vpack.c.b16 %v1031, %v1030
        %v1046 = vpack.c.b16 %v1033, %v1032
        %v1047 = vpack.c.b16 %v1035, %v1034
        %v1048 = vpack.c.b16 %v1037, %v1036
        %v1049 = vpack.c.b16 %v1039, %v1038
        %v1050 = vpack.c.b16 %v1041, %v1040
        %v1051 = vpack.c.b16 %v1043, %v1042
        %v1076 = vunpack.c.l.b16 %v627
        %v1077 = vunpack.c.l.b16 %v629
        %v1078 = vunpack.c.l.b16 %v631
        %v1079 = vunpack.c.l.b16 %v633
        %v1080 = vunpack.c.l.b16 %v635
        %v1081 = vunpack.c.l.b16 %v637
        %v1082 = vunpack.c.l.b16 %v639
        %v1083 = vunpack.c.l.b16 %v641
        %v1084 = vunpack.c.l.b16 %v643
        %v1085 = vunpack.c.l.b16 %v645
        %v1086 = vunpack.c.l.b16 %v647
        %v1087 = vunpack.c.l.b16 %v649
        %v1088 = vunpack.c.l.b16 %v651
        %v1089 = vunpack.c.l.b16 %v653
        %v1090 = vunpack.c.l.b16 %v655
        %v1091 = vunpack.c.l.b16 %v657
        %v1092 = vpack.c.b16 %v1077, %v1076
        %v1093 = vpack.c.b16 %v1079, %v1078
        %v1094 = vpack.c.b16 %v1081, %v1080
        %v1095 = vpack.c.b16 %v1083, %v1082
        %v1096 = vpack.c.b16 %v1085, %v1084
        %v1097 = vpack.c.b16 %v1087, %v1086
        %v1098 = vpack.c.b16 %v1089, %v1088
        %v1099 = vpack.c.b16 %v1091, %v1090
        %1108 = vmatpush.bf16.msra.mxu0 %v1099
        %1109 = vmatpush.bf16.msra.mxu0 %v1098
        %1110 = vmatpush.bf16.msra.mxu0 %v1097
        %1111 = vmatpush.bf16.msra.mxu0 %v1096
        %1112 = vmatpush.bf16.msra.mxu0 %v1095
        %1113 = vmatpush.bf16.msra.mxu0 %v1094
        %1114 = vmatpush.bf16.msra.mxu0 %v1093
        %1115 = vmatpush.bf16.msra.mxu0 %v1092
        %1116 = vmatmul.bf16.gmra.mxu0 %v1044
        %v1117 = vpop.f32.mrf.mxu0
        %v1118 = vadd.f32 0.0, %v1117
        %v1119 = vpop.f32.mrf.mxu0
        %v1120 = vadd.f32 0.0, %v1119
        %1121 = vmatmul.bf16.gmra.mxu0 %v1045
        %v1122 = vpop.f32.mrf.mxu0
        %v1123 = vadd.f32 0.0, %v1122
        %v1124 = vpop.f32.mrf.mxu0
        %v1125 = vadd.f32 0.0, %v1124
        %1126 = vmatmul.bf16.gmra.mxu0 %v1046
        %v1127 = vpop.f32.mrf.mxu0
        %v1128 = vadd.f32 0.0, %v1127
        %v1129 = vpop.f32.mrf.mxu0
        %v1130 = vadd.f32 0.0, %v1129
        %1131 = vmatmul.bf16.gmra.mxu0 %v1047
        %v1132 = vpop.f32.mrf.mxu0
        %v1133 = vadd.f32 0.0, %v1132
        %v1134 = vpop.f32.mrf.mxu0
        %v1135 = vadd.f32 0.0, %v1134
        %1136 = vmatmul.bf16.gmra.mxu0 %v1048
        %v1137 = vpop.f32.mrf.mxu0
        %v1138 = vadd.f32 0.0, %v1137
        %v1139 = vpop.f32.mrf.mxu0
        %v1140 = vadd.f32 0.0, %v1139
        %1141 = vmatmul.bf16.gmra.mxu0 %v1049
        %v1142 = vpop.f32.mrf.mxu0
        %v1143 = vadd.f32 0.0, %v1142
        %v1144 = vpop.f32.mrf.mxu0
        %v1145 = vadd.f32 0.0, %v1144
        %1146 = vmatmul.bf16.gmra.mxu0 %v1050
        %v1147 = vpop.f32.mrf.mxu0
        %v1148 = vadd.f32 0.0, %v1147
        %v1149 = vpop.f32.mrf.mxu0
        %v1150 = vadd.f32 0.0, %v1149
        %1151 = vmatmul.bf16.gmra.mxu0 %v1051
        %v1152 = vpop.f32.mrf.mxu0
        %v1153 = vadd.f32 0.0, %v1152
        %v1154 = vpop.f32.mrf.mxu0
        %v1155 = vadd.f32 0.0, %v1154
        %1156 = vdwg.mxu0
        %v1157 = vpack.c.bf16 %v1118, %v1118
        %v1158 = vpack.c.bf16 %v1120, %v1120
        %v1159 = vpack.c.bf16 %v1123, %v1123
        %v1160 = vpack.c.bf16 %v1125, %v1125
        %v1161 = vpack.c.bf16 %v1128, %v1128
        %v1162 = vpack.c.bf16 %v1130, %v1130
        %v1163 = vpack.c.bf16 %v1133, %v1133
        %v1164 = vpack.c.bf16 %v1135, %v1135
        %v1165 = vpack.c.bf16 %v1138, %v1138
        %v1166 = vpack.c.bf16 %v1140, %v1140
        %v1167 = vpack.c.bf16 %v1143, %v1143
        %v1168 = vpack.c.bf16 %v1145, %v1145
        %v1169 = vpack.c.bf16 %v1148, %v1148
        %v1170 = vpack.c.bf16 %v1150, %v1150
        %v1171 = vpack.c.bf16 %v1153, %v1153
        %v1172 = vpack.c.bf16 %v1155, %v1155
        %vm1173 = vcmask 257024
        %1174 = vst.msk [vmem:[#allocation2] sm:$0xf] %vm1173, %v1157
        %1175 = vst.msk [vmem:[#allocation2 + $0x4] sm:$0xf] %vm1173, %v1158
        %1176 = vst.msk [vmem:[#allocation2 + $0x8] sm:$0xf] %vm1173, %v1159
        %1177 = vst.msk [vmem:[#allocation2 + $0xc] sm:$0xf] %vm1173, %v1160
        %1178 = vst.msk [vmem:[#allocation2 + $0x10] sm:$0xf] %vm1173, %v1161
        %1179 = vst.msk [vmem:[#allocation2 + $0x14] sm:$0xf] %vm1173, %v1162
        %1180 = vst.msk [vmem:[#allocation2 + $0x18] sm:$0xf] %vm1173, %v1163
        %1181 = vst.msk [vmem:[#allocation2 + $0x1c] sm:$0xf] %vm1173, %v1164
        %1182 = vst.msk [vmem:[#allocation2 + $0x20] sm:$0xf] %vm1173, %v1165
        %1183 = vst.msk [vmem:[#allocation2 + $0x24] sm:$0xf] %vm1173, %v1166
        %1184 = vst.msk [vmem:[#allocation2 + $0x28] sm:$0xf] %vm1173, %v1167
        %1185 = vst.msk [vmem:[#allocation2 + $0x2c] sm:$0xf] %vm1173, %v1168
        %1186 = vst.msk [vmem:[#allocation2 + $0x30] sm:$0xf] %vm1173, %v1169
        %1187 = vst.msk [vmem:[#allocation2 + $0x34] sm:$0xf] %vm1173, %v1170
        %1188 = vst.msk [vmem:[#allocation2 + $0x38] sm:$0xf] %vm1173, %v1171
        %1189 = vst.msk [vmem:[#allocation2 + $0x3c] sm:$0xf] %vm1173, %v1172
        %1190 = vrot.lane.b32.xlu0 %v626, 96
        %v1191 = vpop.permute.xlu0 %1190
        %1192 = vrot.lane.b32.xlu0 %v628, 96
        %v1193 = vpop.permute.xlu0 %1192
        %1194 = vrot.lane.b32.xlu0 %v630, 96
        %v1195 = vpop.permute.xlu0 %1194
        %1196 = vrot.lane.b32.xlu0 %v632, 96
        %v1197 = vpop.permute.xlu0 %1196
        %1198 = vrot.lane.b32.xlu0 %v634, 96
        %v1199 = vpop.permute.xlu0 %1198
        %1200 = vrot.lane.b32.xlu0 %v636, 96
        %v1201 = vpop.permute.xlu0 %1200
        %1202 = vrot.lane.b32.xlu0 %v638, 96
        %v1203 = vpop.permute.xlu0 %1202
        %1204 = vrot.lane.b32.xlu0 %v640, 96
        %v1205 = vpop.permute.xlu0 %1204
        %1206 = vrot.lane.b32.xlu0 %v642, 96
        %v1207 = vpop.permute.xlu0 %1206
        %1208 = vrot.lane.b32.xlu0 %v644, 96
        %v1209 = vpop.permute.xlu0 %1208
        %1210 = vrot.lane.b32.xlu0 %v646, 96
        %v1211 = vpop.permute.xlu0 %1210
        %1212 = vrot.lane.b32.xlu0 %v648, 96
        %v1213 = vpop.permute.xlu0 %1212
        %1214 = vrot.lane.b32.xlu0 %v650, 96
        %v1215 = vpop.permute.xlu0 %1214
        %1216 = vrot.lane.b32.xlu0 %v652, 96
        %v1217 = vpop.permute.xlu0 %1216
        %1218 = vrot.lane.b32.xlu0 %v654, 96
        %v1219 = vpop.permute.xlu0 %1218
        %1220 = vrot.lane.b32.xlu0 %v656, 96
        %v1221 = vpop.permute.xlu0 %1220
        %v1222 = vrot.slane %v1191, 4
        %v1223 = vrot.slane %v1193, 4
        %v1224 = vrot.slane %v1195, 4
        %v1225 = vrot.slane %v1197, 4
        %v1226 = vrot.slane %v1199, 4
        %v1227 = vrot.slane %v1201, 4
        %v1228 = vrot.slane %v1203, 4
        %v1229 = vrot.slane %v1205, 4
        %v1230 = vrot.slane %v1207, 4
        %v1231 = vrot.slane %v1209, 4
        %v1232 = vrot.slane %v1211, 4
        %v1233 = vrot.slane %v1213, 4
        %v1234 = vrot.slane %v1215, 4
        %v1235 = vrot.slane %v1217, 4
        %v1236 = vrot.slane %v1219, 4
        %v1237 = vrot.slane %v1221, 4
        %1238 = vrot.lane.b32.xlu0 %v722, 96
        %v1239 = vpop.permute.xlu0 %1238
        %1240 = vrot.lane.b32.xlu0 %v723, 96
        %v1241 = vpop.permute.xlu0 %1240
        %1242 = vrot.lane.b32.xlu0 %v724, 96
        %v1243 = vpop.permute.xlu0 %1242
        %1244 = vrot.lane.b32.xlu0 %v725, 96
        %v1245 = vpop.permute.xlu0 %1244
        %1246 = vrot.lane.b32.xlu0 %v726, 96
        %v1247 = vpop.permute.xlu0 %1246
        %1248 = vrot.lane.b32.xlu0 %v727, 96
        %v1249 = vpop.permute.xlu0 %1248
        %1250 = vrot.lane.b32.xlu0 %v728, 96
        %v1251 = vpop.permute.xlu0 %1250
        %1252 = vrot.lane.b32.xlu0 %v729, 96
        %v1253 = vpop.permute.xlu0 %1252
        %v1254 = vunpack.c.l.b16 %v1222
        %v1255 = vunpack.c.l.b16 %v1223
        %v1256 = vunpack.c.l.b16 %v1224
        %v1257 = vunpack.c.l.b16 %v1225
        %v1258 = vunpack.c.l.b16 %v1226
        %v1259 = vunpack.c.l.b16 %v1227
        %v1260 = vunpack.c.l.b16 %v1228
        %v1261 = vunpack.c.l.b16 %v1229
        %v1262 = vunpack.c.l.b16 %v1230
        %v1263 = vunpack.c.l.b16 %v1231
        %v1264 = vunpack.c.l.b16 %v1232
        %v1265 = vunpack.c.l.b16 %v1233
        %v1266 = vunpack.c.l.b16 %v1234
        %v1267 = vunpack.c.l.b16 %v1235
        %v1268 = vunpack.c.l.b16 %v1236
        %v1269 = vunpack.c.l.b16 %v1237
        %v1270 = vpack.c.b16 %v1255, %v1254
        %v1271 = vpack.c.b16 %v1257, %v1256
        %v1272 = vpack.c.b16 %v1259, %v1258
        %v1273 = vpack.c.b16 %v1261, %v1260
        %v1274 = vpack.c.b16 %v1263, %v1262
        %v1275 = vpack.c.b16 %v1265, %v1264
        %v1276 = vpack.c.b16 %v1267, %v1266
        %v1277 = vpack.c.b16 %v1269, %v1268
        %v1279 = vsel %vm754, %v1239, 0
        %v1282 = vsel %vm754, %v1241, 0
        %v1285 = vsel %vm754, %v1243, 0
        %v1288 = vsel %vm754, %v1245, 0
        %v1291 = vsel %vm754, %v1247, 0
        %v1294 = vsel %vm754, %v1249, 0
        %v1297 = vsel %vm754, %v1251, 0
        %v1300 = vsel %vm754, %v1253, 0
        %v1303 = vsel %vm754, %v1270, 0
        %v1306 = vsel %vm754, %v1271, 0
        %v1309 = vsel %vm754, %v1272, 0
        %v1312 = vsel %vm754, %v1273, 0
        %v1315 = vsel %vm754, %v1274, 0
        %v1318 = vsel %vm754, %v1275, 0
        %v1321 = vsel %vm754, %v1276, 0
        %v1324 = vsel %vm754, %v1277, 0
        %1326 = vmatpush.bf16.xpose.msra.mxu0 %v1324
        %1327 = vmatpush.bf16.xpose.msra.mxu0 %v1321
        %1328 = vmatpush.bf16.xpose.msra.mxu0 %v1318
        %1329 = vmatpush.bf16.xpose.msra.mxu0 %v1315
        %1330 = vmatpush.bf16.xpose.msra.mxu0 %v1312
        %1331 = vmatpush.bf16.xpose.msra.mxu0 %v1309
        %1332 = vmatpush.bf16.xpose.msra.mxu0 %v1306
        %1333 = vmatpush.bf16.xpose.msra.mxu0 %v1303
        %1334 = vmatmul.bf16.gmra.mxu0 %v1279
        %v1335 = vpop.f32.mrf.mxu0
        %v1336 = vadd.f32 %v658, %v1335
        %v1337 = vpop.f32.mrf.mxu0
        %v1338 = vadd.f32 %v659, %v1337
        %1339 = vmatmul.bf16.gmra.mxu0 %v1282
        %v1340 = vpop.f32.mrf.mxu0
        %v1341 = vadd.f32 %v660, %v1340
        %v1342 = vpop.f32.mrf.mxu0
        %v1343 = vadd.f32 %v661, %v1342
        %1344 = vmatmul.bf16.gmra.mxu0 %v1285
        %v1345 = vpop.f32.mrf.mxu0
        %v1346 = vadd.f32 %v662, %v1345
        %v1347 = vpop.f32.mrf.mxu0
        %v1348 = vadd.f32 %v663, %v1347
        %1349 = vmatmul.bf16.gmra.mxu0 %v1288
        %v1350 = vpop.f32.mrf.mxu0
        %v1351 = vadd.f32 %v664, %v1350
        %v1352 = vpop.f32.mrf.mxu0
        %v1353 = vadd.f32 %v665, %v1352
        %1354 = vmatmul.bf16.gmra.mxu0 %v1291
        %v1355 = vpop.f32.mrf.mxu0
        %v1356 = vadd.f32 %v666, %v1355
        %v1357 = vpop.f32.mrf.mxu0
        %v1358 = vadd.f32 %v667, %v1357
        %1359 = vmatmul.bf16.gmra.mxu0 %v1294
        %v1360 = vpop.f32.mrf.mxu0
        %v1361 = vadd.f32 %v668, %v1360
        %v1362 = vpop.f32.mrf.mxu0
        %v1363 = vadd.f32 %v669, %v1362
        %1364 = vmatmul.bf16.gmra.mxu0 %v1297
        %v1365 = vpop.f32.mrf.mxu0
        %v1366 = vadd.f32 %v670, %v1365
        %v1367 = vpop.f32.mrf.mxu0
        %v1368 = vadd.f32 %v671, %v1367
        %1369 = vmatmul.bf16.gmra.mxu0 %v1300
        %v1370 = vpop.f32.mrf.mxu0
        %v1371 = vadd.f32 %v672, %v1370
        %v1372 = vpop.f32.mrf.mxu0
        %v1373 = vadd.f32 %v673, %v1372
        %1374 = vdwg.mxu0
        %1375 = vmax.xlane.f32.xlu0 %v1336
        %v1376 = vpop.xlane.xlu0 %1375
        %1377 = vmax.xlane.f32.xlu0 %v1338
        %v1378 = vpop.xlane.xlu0 %1377
        %1379 = vmax.xlane.f32.xlu0 %v1341
        %v1380 = vpop.xlane.xlu0 %1379
        %1381 = vmax.xlane.f32.xlu0 %v1343
        %v1382 = vpop.xlane.xlu0 %1381
        %1383 = vmax.xlane.f32.xlu0 %v1346
        %v1384 = vpop.xlane.xlu0 %1383
        %1385 = vmax.xlane.f32.xlu0 %v1348
        %v1386 = vpop.xlane.xlu0 %1385
        %1387 = vmax.xlane.f32.xlu0 %v1351
        %v1388 = vpop.xlane.xlu0 %1387
        %1389 = vmax.xlane.f32.xlu0 %v1353
        %v1390 = vpop.xlane.xlu0 %1389
        %1391 = vmax.xlane.f32.xlu0 %v1356
        %v1392 = vpop.xlane.xlu0 %1391
        %1393 = vmax.xlane.f32.xlu0 %v1358
        %v1394 = vpop.xlane.xlu0 %1393
        %1395 = vmax.xlane.f32.xlu0 %v1361
        %v1396 = vpop.xlane.xlu0 %1395
        %1397 = vmax.xlane.f32.xlu0 %v1363
        %v1398 = vpop.xlane.xlu0 %1397
        %1399 = vmax.xlane.f32.xlu0 %v1366
        %v1400 = vpop.xlane.xlu0 %1399
        %1401 = vmax.xlane.f32.xlu0 %v1368
        %v1402 = vpop.xlane.xlu0 %1401
        %1403 = vmax.xlane.f32.xlu0 %v1371
        %v1404 = vpop.xlane.xlu0 %1403
        %1405 = vmax.xlane.f32.xlu0 %v1373
        %v1406 = vpop.xlane.xlu0 %1405
        %v1407 = vsub.f32 %v1336, %v1376
        %v1408 = vsub.f32 %v1338, %v1378
        %v1409 = vsub.f32 %v1341, %v1380
        %v1410 = vsub.f32 %v1343, %v1382
        %v1411 = vsub.f32 %v1346, %v1384
        %v1412 = vsub.f32 %v1348, %v1386
        %v1413 = vsub.f32 %v1351, %v1388
        %v1414 = vsub.f32 %v1353, %v1390
        %v1415 = vsub.f32 %v1356, %v1392
        %v1416 = vsub.f32 %v1358, %v1394
        %v1417 = vsub.f32 %v1361, %v1396
        %v1418 = vsub.f32 %v1363, %v1398
        %v1419 = vsub.f32 %v1366, %v1400
        %v1420 = vsub.f32 %v1368, %v1402
        %v1421 = vsub.f32 %v1371, %v1404
        %v1422 = vsub.f32 %v1373, %v1406
        %v1423 = vmul.f32 %v1407, 1.442695
        %v1424 = vpow.pop %v1423
        %v1425 = vmul.f32 %v1408, 1.442695
        %v1426 = vpow.pop %v1425
        %v1427 = vmul.f32 %v1409, 1.442695
        %v1428 = vpow.pop %v1427
        %v1429 = vmul.f32 %v1410, 1.442695
        %v1430 = vpow.pop %v1429
        %v1431 = vmul.f32 %v1411, 1.442695
        %v1432 = vpow.pop %v1431
        %v1433 = vmul.f32 %v1412, 1.442695
        %v1434 = vpow.pop %v1433
        %v1435 = vmul.f32 %v1413, 1.442695
        %v1436 = vpow.pop %v1435
        %v1437 = vmul.f32 %v1414, 1.442695
        %v1438 = vpow.pop %v1437
        %v1439 = vmul.f32 %v1415, 1.442695
        %v1440 = vpow.pop %v1439
        %v1441 = vmul.f32 %v1416, 1.442695
        %v1442 = vpow.pop %v1441
        %v1443 = vmul.f32 %v1417, 1.442695
        %v1444 = vpow.pop %v1443
        %v1445 = vmul.f32 %v1418, 1.442695
        %v1446 = vpow.pop %v1445
        %v1447 = vmul.f32 %v1419, 1.442695
        %v1448 = vpow.pop %v1447
        %v1449 = vmul.f32 %v1420, 1.442695
        %v1450 = vpow.pop %v1449
        %v1451 = vmul.f32 %v1421, 1.442695
        %v1452 = vpow.pop %v1451
        %v1453 = vmul.f32 %v1422, 1.442695
        %v1454 = vpow.pop %v1453
        %1455 = vadd.xlane.f32.xlu0 %v1424
        %v1456 = vpop.xlane.xlu0 %1455
        %1457 = vadd.xlane.f32.xlu0 %v1426
        %v1458 = vpop.xlane.xlu0 %1457
        %1459 = vadd.xlane.f32.xlu0 %v1428
        %v1460 = vpop.xlane.xlu0 %1459
        %1461 = vadd.xlane.f32.xlu0 %v1430
        %v1462 = vpop.xlane.xlu0 %1461
        %1463 = vadd.xlane.f32.xlu0 %v1432
        %v1464 = vpop.xlane.xlu0 %1463
        %1465 = vadd.xlane.f32.xlu0 %v1434
        %v1466 = vpop.xlane.xlu0 %1465
        %1467 = vadd.xlane.f32.xlu0 %v1436
        %v1468 = vpop.xlane.xlu0 %1467
        %1469 = vadd.xlane.f32.xlu0 %v1438
        %v1470 = vpop.xlane.xlu0 %1469
        %1471 = vadd.xlane.f32.xlu0 %v1440
        %v1472 = vpop.xlane.xlu0 %1471
        %1473 = vadd.xlane.f32.xlu0 %v1442
        %v1474 = vpop.xlane.xlu0 %1473
        %1475 = vadd.xlane.f32.xlu0 %v1444
        %v1476 = vpop.xlane.xlu0 %1475
        %1477 = vadd.xlane.f32.xlu0 %v1446
        %v1478 = vpop.xlane.xlu0 %1477
        %1479 = vadd.xlane.f32.xlu0 %v1448
        %v1480 = vpop.xlane.xlu0 %1479
        %1481 = vadd.xlane.f32.xlu0 %v1450
        %v1482 = vpop.xlane.xlu0 %1481
        %1483 = vadd.xlane.f32.xlu0 %v1452
        %v1484 = vpop.xlane.xlu0 %1483
        %1485 = vadd.xlane.f32.xlu0 %v1454
        %v1486 = vpop.xlane.xlu0 %1485
        %v1487 = vrcp.pop %v1456
        %v1488 = vrcp.pop %v1458
        %v1489 = vrcp.pop %v1460
        %v1490 = vrcp.pop %v1462
        %v1491 = vrcp.pop %v1464
        %v1492 = vrcp.pop %v1466
        %v1493 = vrcp.pop %v1468
        %v1494 = vrcp.pop %v1470
        %v1495 = vrcp.pop %v1472
        %v1496 = vrcp.pop %v1474
        %v1497 = vrcp.pop %v1476
        %v1498 = vrcp.pop %v1478
        %v1499 = vrcp.pop %v1480
        %v1500 = vrcp.pop %v1482
        %v1501 = vrcp.pop %v1484
        %v1502 = vrcp.pop %v1486
        %v1503 = vmul.f32 %v1424, %v1487
        %v1504 = vmul.f32 %v1426, %v1488
        %v1505 = vmul.f32 %v1428, %v1489
        %v1506 = vmul.f32 %v1430, %v1490
        %v1507 = vmul.f32 %v1432, %v1491
        %v1508 = vmul.f32 %v1434, %v1492
        %v1509 = vmul.f32 %v1436, %v1493
        %v1510 = vmul.f32 %v1438, %v1494
        %v1511 = vmul.f32 %v1440, %v1495
        %v1512 = vmul.f32 %v1442, %v1496
        %v1513 = vmul.f32 %v1444, %v1497
        %v1514 = vmul.f32 %v1446, %v1498
        %v1515 = vmul.f32 %v1448, %v1499
        %v1516 = vmul.f32 %v1450, %v1500
        %v1517 = vmul.f32 %v1452, %v1501
        %v1518 = vmul.f32 %v1454, %v1502
        %v1519 = vpack.c.bf16 %v1503, %v1503
        %v1520 = vpack.c.bf16 %v1504, %v1504
        %v1521 = vpack.c.bf16 %v1505, %v1505
        %v1522 = vpack.c.bf16 %v1506, %v1506
        %v1523 = vpack.c.bf16 %v1507, %v1507
        %v1524 = vpack.c.bf16 %v1508, %v1508
        %v1525 = vpack.c.bf16 %v1509, %v1509
        %v1526 = vpack.c.bf16 %v1510, %v1510
        %v1527 = vpack.c.bf16 %v1511, %v1511
        %v1528 = vpack.c.bf16 %v1512, %v1512
        %v1529 = vpack.c.bf16 %v1513, %v1513
        %v1530 = vpack.c.bf16 %v1514, %v1514
        %v1531 = vpack.c.bf16 %v1515, %v1515
        %v1532 = vpack.c.bf16 %v1516, %v1516
        %v1533 = vpack.c.bf16 %v1517, %v1517
        %v1534 = vpack.c.bf16 %v1518, %v1518
        %v1551 = vunpack.c.l.b16 %v1519
        %v1552 = vunpack.c.l.b16 %v1520
        %v1553 = vunpack.c.l.b16 %v1521
        %v1554 = vunpack.c.l.b16 %v1522
        %v1555 = vunpack.c.l.b16 %v1523
        %v1556 = vunpack.c.l.b16 %v1524
        %v1557 = vunpack.c.l.b16 %v1525
        %v1558 = vunpack.c.l.b16 %v1526
        %v1559 = vunpack.c.l.b16 %v1527
        %v1560 = vunpack.c.l.b16 %v1528
        %v1561 = vunpack.c.l.b16 %v1529
        %v1562 = vunpack.c.l.b16 %v1530
        %v1563 = vunpack.c.l.b16 %v1531
        %v1564 = vunpack.c.l.b16 %v1532
        %v1565 = vunpack.c.l.b16 %v1533
        %v1566 = vunpack.c.l.b16 %v1534
        %v1567 = vpack.c.b16 %v1552, %v1551
        %v1568 = vpack.c.b16 %v1554, %v1553
        %v1569 = vpack.c.b16 %v1556, %v1555
        %v1570 = vpack.c.b16 %v1558, %v1557
        %v1571 = vpack.c.b16 %v1560, %v1559
        %v1572 = vpack.c.b16 %v1562, %v1561
        %v1573 = vpack.c.b16 %v1564, %v1563
        %v1574 = vpack.c.b16 %v1566, %v1565
        %1583 = vrot.lane.b32.xlu0 %v1092, 96
        %v1584 = vpop.permute.xlu0 %1583
        %1585 = vrot.lane.b32.xlu0 %v1093, 96
        %v1586 = vpop.permute.xlu0 %1585
        %1587 = vrot.lane.b32.xlu0 %v1094, 96
        %v1588 = vpop.permute.xlu0 %1587
        %1589 = vrot.lane.b32.xlu0 %v1095, 96
        %v1590 = vpop.permute.xlu0 %1589
        %1591 = vrot.lane.b32.xlu0 %v1096, 96
        %v1592 = vpop.permute.xlu0 %1591
        %1593 = vrot.lane.b32.xlu0 %v1097, 96
        %v1594 = vpop.permute.xlu0 %1593
        %1595 = vrot.lane.b32.xlu0 %v1098, 96
        %v1596 = vpop.permute.xlu0 %1595
        %1597 = vrot.lane.b32.xlu0 %v1099, 96
        %v1598 = vpop.permute.xlu0 %1597
        %1607 = vmatpush.bf16.msra.mxu0 %v1598
        %1608 = vmatpush.bf16.msra.mxu0 %v1596
        %1609 = vmatpush.bf16.msra.mxu0 %v1594
        %1610 = vmatpush.bf16.msra.mxu0 %v1592
        %1611 = vmatpush.bf16.msra.mxu0 %v1590
        %1612 = vmatpush.bf16.msra.mxu0 %v1588
        %1613 = vmatpush.bf16.msra.mxu0 %v1586
        %1614 = vmatpush.bf16.msra.mxu0 %v1584
        %1615 = vmatmul.bf16.gmra.mxu0 %v1567
        %v1616 = vpop.f32.mrf.mxu0
        %v1617 = vadd.f32 0.0, %v1616
        %v1618 = vpop.f32.mrf.mxu0
        %v1619 = vadd.f32 0.0, %v1618
        %1620 = vmatmul.bf16.gmra.mxu0 %v1568
        %v1621 = vpop.f32.mrf.mxu0
        %v1622 = vadd.f32 0.0, %v1621
        %v1623 = vpop.f32.mrf.mxu0
        %v1624 = vadd.f32 0.0, %v1623
        %1625 = vmatmul.bf16.gmra.mxu0 %v1569
        %v1626 = vpop.f32.mrf.mxu0
        %v1627 = vadd.f32 0.0, %v1626
        %v1628 = vpop.f32.mrf.mxu0
        %v1629 = vadd.f32 0.0, %v1628
        %1630 = vmatmul.bf16.gmra.mxu0 %v1570
        %v1631 = vpop.f32.mrf.mxu0
        %v1632 = vadd.f32 0.0, %v1631
        %v1633 = vpop.f32.mrf.mxu0
        %v1634 = vadd.f32 0.0, %v1633
        %1635 = vmatmul.bf16.gmra.mxu0 %v1571
        %v1636 = vpop.f32.mrf.mxu0
        %v1637 = vadd.f32 0.0, %v1636
        %v1638 = vpop.f32.mrf.mxu0
        %v1639 = vadd.f32 0.0, %v1638
        %1640 = vmatmul.bf16.gmra.mxu0 %v1572
        %v1641 = vpop.f32.mrf.mxu0
        %v1642 = vadd.f32 0.0, %v1641
        %v1643 = vpop.f32.mrf.mxu0
        %v1644 = vadd.f32 0.0, %v1643
        %1645 = vmatmul.bf16.gmra.mxu0 %v1573
        %v1646 = vpop.f32.mrf.mxu0
        %v1647 = vadd.f32 0.0, %v1646
        %v1648 = vpop.f32.mrf.mxu0
        %v1649 = vadd.f32 0.0, %v1648
        %1650 = vmatmul.bf16.gmra.mxu0 %v1574
        %v1651 = vpop.f32.mrf.mxu0
        %v1652 = vadd.f32 0.0, %v1651
        %v1653 = vpop.f32.mrf.mxu0
        %v1654 = vadd.f32 0.0, %v1653
        %1655 = vdwg.mxu0
        %v1656 = vpack.c.bf16 %v1617, %v1617
        %v1657 = vpack.c.bf16 %v1619, %v1619
        %v1658 = vpack.c.bf16 %v1622, %v1622
        %v1659 = vpack.c.bf16 %v1624, %v1624
        %v1660 = vpack.c.bf16 %v1627, %v1627
        %v1661 = vpack.c.bf16 %v1629, %v1629
        %v1662 = vpack.c.bf16 %v1632, %v1632
        %v1663 = vpack.c.bf16 %v1634, %v1634
        %v1664 = vpack.c.bf16 %v1637, %v1637
        %v1665 = vpack.c.bf16 %v1639, %v1639
        %v1666 = vpack.c.bf16 %v1642, %v1642
        %v1667 = vpack.c.bf16 %v1644, %v1644
        %v1668 = vpack.c.bf16 %v1647, %v1647
        %v1669 = vpack.c.bf16 %v1649, %v1649
        %v1670 = vpack.c.bf16 %v1652, %v1652
        %v1671 = vpack.c.bf16 %v1654, %v1654
        %1688 = vrot.lane.b32.xlu0 %v1656, 32
        %v1689 = vpop.permute.xlu0 %1688
        %1690 = vrot.lane.b32.xlu0 %v1657, 32
        %v1691 = vpop.permute.xlu0 %1690
        %1692 = vrot.lane.b32.xlu0 %v1658, 32
        %v1693 = vpop.permute.xlu0 %1692
        %1694 = vrot.lane.b32.xlu0 %v1659, 32
        %v1695 = vpop.permute.xlu0 %1694
        %1696 = vrot.lane.b32.xlu0 %v1660, 32
        %v1697 = vpop.permute.xlu0 %1696
        %1698 = vrot.lane.b32.xlu0 %v1661, 32
        %v1699 = vpop.permute.xlu0 %1698
        %1700 = vrot.lane.b32.xlu0 %v1662, 32
        %v1701 = vpop.permute.xlu0 %1700
        %1702 = vrot.lane.b32.xlu0 %v1663, 32
        %v1703 = vpop.permute.xlu0 %1702
        %1704 = vrot.lane.b32.xlu0 %v1664, 32
        %v1705 = vpop.permute.xlu0 %1704
        %1706 = vrot.lane.b32.xlu0 %v1665, 32
        %v1707 = vpop.permute.xlu0 %1706
        %1708 = vrot.lane.b32.xlu0 %v1666, 32
        %v1709 = vpop.permute.xlu0 %1708
        %1710 = vrot.lane.b32.xlu0 %v1667, 32
        %v1711 = vpop.permute.xlu0 %1710
        %1712 = vrot.lane.b32.xlu0 %v1668, 32
        %v1713 = vpop.permute.xlu0 %1712
        %1714 = vrot.lane.b32.xlu0 %v1669, 32
        %v1715 = vpop.permute.xlu0 %1714
        %1716 = vrot.lane.b32.xlu0 %v1670, 32
        %v1717 = vpop.permute.xlu0 %1716
        %1718 = vrot.lane.b32.xlu0 %v1671, 32
        %v1719 = vpop.permute.xlu0 %1718
        %vm1736 = vcmask 519424
        %1737 = vst.msk [vmem:[#allocation2] sm:$0xf] %vm1736, %v1689
        %1738 = vst.msk [vmem:[#allocation2 + $0x4] sm:$0xf] %vm1736, %v1691
        %1739 = vst.msk [vmem:[#allocation2 + $0x8] sm:$0xf] %vm1736, %v1693
        %1740 = vst.msk [vmem:[#allocation2 + $0xc] sm:$0xf] %vm1736, %v1695
        %1741 = vst.msk [vmem:[#allocation2 + $0x10] sm:$0xf] %vm1736, %v1697
        %1742 = vst.msk [vmem:[#allocation2 + $0x14] sm:$0xf] %vm1736, %v1699
        %1743 = vst.msk [vmem:[#allocation2 + $0x18] sm:$0xf] %vm1736, %v1701
        %1744 = vst.msk [vmem:[#allocation2 + $0x1c] sm:$0xf] %vm1736, %v1703
        %1745 = vst.msk [vmem:[#allocation2 + $0x20] sm:$0xf] %vm1736, %v1705
        %1746 = vst.msk [vmem:[#allocation2 + $0x24] sm:$0xf] %vm1736, %v1707
        %1747 = vst.msk [vmem:[#allocation2 + $0x28] sm:$0xf] %vm1736, %v1709
        %1748 = vst.msk [vmem:[#allocation2 + $0x2c] sm:$0xf] %vm1736, %v1711
        %1749 = vst.msk [vmem:[#allocation2 + $0x30] sm:$0xf] %vm1736, %v1713
        %1750 = vst.msk [vmem:[#allocation2 + $0x34] sm:$0xf] %vm1736, %v1715
        %1751 = vst.msk [vmem:[#allocation2 + $0x38] sm:$0xf] %vm1736, %v1717
        %1752 = vst.msk [vmem:[#allocation2 + $0x3c] sm:$0xf] %vm1736, %v1719
        %1753 = vrot.lane.b32.xlu0 %v626, 64
        %v1754 = vpop.permute.xlu0 %1753
        %1755 = vrot.lane.b32.xlu0 %v628, 64
        %v1756 = vpop.permute.xlu0 %1755
        %1757 = vrot.lane.b32.xlu0 %v630, 64
        %v1758 = vpop.permute.xlu0 %1757
        %1759 = vrot.lane.b32.xlu0 %v632, 64
        %v1760 = vpop.permute.xlu0 %1759
        %1761 = vrot.lane.b32.xlu0 %v634, 64
        %v1762 = vpop.permute.xlu0 %1761
        %1763 = vrot.lane.b32.xlu0 %v636, 64
        %v1764 = vpop.permute.xlu0 %1763
        %1765 = vrot.lane.b32.xlu0 %v638, 64
        %v1766 = vpop.permute.xlu0 %1765
        %1767 = vrot.lane.b32.xlu0 %v640, 64
        %v1768 = vpop.permute.xlu0 %1767
        %1769 = vrot.lane.b32.xlu0 %v642, 64
        %v1770 = vpop.permute.xlu0 %1769
        %1771 = vrot.lane.b32.xlu0 %v644, 64
        %v1772 = vpop.permute.xlu0 %1771
        %1773 = vrot.lane.b32.xlu0 %v646, 64
        %v1774 = vpop.permute.xlu0 %1773
        %1775 = vrot.lane.b32.xlu0 %v648, 64
        %v1776 = vpop.permute.xlu0 %1775
        %1777 = vrot.lane.b32.xlu0 %v650, 64
        %v1778 = vpop.permute.xlu0 %1777
        %1779 = vrot.lane.b32.xlu0 %v652, 64
        %v1780 = vpop.permute.xlu0 %1779
        %1781 = vrot.lane.b32.xlu0 %v654, 64
        %v1782 = vpop.permute.xlu0 %1781
        %1783 = vrot.lane.b32.xlu0 %v656, 64
        %v1784 = vpop.permute.xlu0 %1783
        %v1785 = vrot.slane %v1754, 4
        %v1786 = vrot.slane %v1756, 4
        %v1787 = vrot.slane %v1758, 4
        %v1788 = vrot.slane %v1760, 4
        %v1789 = vrot.slane %v1762, 4
        %v1790 = vrot.slane %v1764, 4
        %v1791 = vrot.slane %v1766, 4
        %v1792 = vrot.slane %v1768, 4
        %v1793 = vrot.slane %v1770, 4
        %v1794 = vrot.slane %v1772, 4
        %v1795 = vrot.slane %v1774, 4
        %v1796 = vrot.slane %v1776, 4
        %v1797 = vrot.slane %v1778, 4
        %v1798 = vrot.slane %v1780, 4
        %v1799 = vrot.slane %v1782, 4
        %v1800 = vrot.slane %v1784, 4
        %1801 = vrot.lane.b32.xlu0 %v722, 64
        %v1802 = vpop.permute.xlu0 %1801
        %1803 = vrot.lane.b32.xlu0 %v723, 64
        %v1804 = vpop.permute.xlu0 %1803
        %1805 = vrot.lane.b32.xlu0 %v724, 64
        %v1806 = vpop.permute.xlu0 %1805
        %1807 = vrot.lane.b32.xlu0 %v725, 64
        %v1808 = vpop.permute.xlu0 %1807
        %1809 = vrot.lane.b32.xlu0 %v726, 64
        %v1810 = vpop.permute.xlu0 %1809
        %1811 = vrot.lane.b32.xlu0 %v727, 64
        %v1812 = vpop.permute.xlu0 %1811
        %1813 = vrot.lane.b32.xlu0 %v728, 64
        %v1814 = vpop.permute.xlu0 %1813
        %1815 = vrot.lane.b32.xlu0 %v729, 64
        %v1816 = vpop.permute.xlu0 %1815
        %v1817 = vunpack.c.l.b16 %v1785
        %v1818 = vunpack.c.l.b16 %v1786
        %v1819 = vunpack.c.l.b16 %v1787
        %v1820 = vunpack.c.l.b16 %v1788
        %v1821 = vunpack.c.l.b16 %v1789
        %v1822 = vunpack.c.l.b16 %v1790
        %v1823 = vunpack.c.l.b16 %v1791
        %v1824 = vunpack.c.l.b16 %v1792
        %v1825 = vunpack.c.l.b16 %v1793
        %v1826 = vunpack.c.l.b16 %v1794
        %v1827 = vunpack.c.l.b16 %v1795
        %v1828 = vunpack.c.l.b16 %v1796
        %v1829 = vunpack.c.l.b16 %v1797
        %v1830 = vunpack.c.l.b16 %v1798
        %v1831 = vunpack.c.l.b16 %v1799
        %v1832 = vunpack.c.l.b16 %v1800
        %v1833 = vpack.c.b16 %v1818, %v1817
        %v1834 = vpack.c.b16 %v1820, %v1819
        %v1835 = vpack.c.b16 %v1822, %v1821
        %v1836 = vpack.c.b16 %v1824, %v1823
        %v1837 = vpack.c.b16 %v1826, %v1825
        %v1838 = vpack.c.b16 %v1828, %v1827
        %v1839 = vpack.c.b16 %v1830, %v1829
        %v1840 = vpack.c.b16 %v1832, %v1831
        %v1842 = vsel %vm754, %v1802, 0
        %v1845 = vsel %vm754, %v1804, 0
        %v1848 = vsel %vm754, %v1806, 0
        %v1851 = vsel %vm754, %v1808, 0
        %v1854 = vsel %vm754, %v1810, 0
        %v1857 = vsel %vm754, %v1812, 0
        %v1860 = vsel %vm754, %v1814, 0
        %v1863 = vsel %vm754, %v1816, 0
        %v1866 = vsel %vm754, %v1833, 0
        %v1869 = vsel %vm754, %v1834, 0
        %v1872 = vsel %vm754, %v1835, 0
        %v1875 = vsel %vm754, %v1836, 0
        %v1878 = vsel %vm754, %v1837, 0
        %v1881 = vsel %vm754, %v1838, 0
        %v1884 = vsel %vm754, %v1839, 0
        %v1887 = vsel %vm754, %v1840, 0
        %1889 = vmatpush.bf16.xpose.msra.mxu0 %v1887
        %1890 = vmatpush.bf16.xpose.msra.mxu0 %v1884
        %1891 = vmatpush.bf16.xpose.msra.mxu0 %v1881
        %1892 = vmatpush.bf16.xpose.msra.mxu0 %v1878
        %1893 = vmatpush.bf16.xpose.msra.mxu0 %v1875
        %1894 = vmatpush.bf16.xpose.msra.mxu0 %v1872
        %1895 = vmatpush.bf16.xpose.msra.mxu0 %v1869
        %1896 = vmatpush.bf16.xpose.msra.mxu0 %v1866
        %1897 = vmatmul.bf16.gmra.mxu0 %v1842
        %v1898 = vpop.f32.mrf.mxu0
        %v1899 = vadd.f32 %v658, %v1898
        %v1900 = vpop.f32.mrf.mxu0
        %v1901 = vadd.f32 %v659, %v1900
        %1902 = vmatmul.bf16.gmra.mxu0 %v1845
        %v1903 = vpop.f32.mrf.mxu0
        %v1904 = vadd.f32 %v660, %v1903
        %v1905 = vpop.f32.mrf.mxu0
        %v1906 = vadd.f32 %v661, %v1905
        %1907 = vmatmul.bf16.gmra.mxu0 %v1848
        %v1908 = vpop.f32.mrf.mxu0
        %v1909 = vadd.f32 %v662, %v1908
        %v1910 = vpop.f32.mrf.mxu0
        %v1911 = vadd.f32 %v663, %v1910
        %1912 = vmatmul.bf16.gmra.mxu0 %v1851
        %v1913 = vpop.f32.mrf.mxu0
        %v1914 = vadd.f32 %v664, %v1913
        %v1915 = vpop.f32.mrf.mxu0
        %v1916 = vadd.f32 %v665, %v1915
        %1917 = vmatmul.bf16.gmra.mxu0 %v1854
        %v1918 = vpop.f32.mrf.mxu0
        %v1919 = vadd.f32 %v666, %v1918
        %v1920 = vpop.f32.mrf.mxu0
        %v1921 = vadd.f32 %v667, %v1920
        %1922 = vmatmul.bf16.gmra.mxu0 %v1857
        %v1923 = vpop.f32.mrf.mxu0
        %v1924 = vadd.f32 %v668, %v1923
        %v1925 = vpop.f32.mrf.mxu0
        %v1926 = vadd.f32 %v669, %v1925
        %1927 = vmatmul.bf16.gmra.mxu0 %v1860
        %v1928 = vpop.f32.mrf.mxu0
        %v1929 = vadd.f32 %v670, %v1928
        %v1930 = vpop.f32.mrf.mxu0
        %v1931 = vadd.f32 %v671, %v1930
        %1932 = vmatmul.bf16.gmra.mxu0 %v1863
        %v1933 = vpop.f32.mrf.mxu0
        %v1934 = vadd.f32 %v672, %v1933
        %v1935 = vpop.f32.mrf.mxu0
        %v1936 = vadd.f32 %v673, %v1935
        %1937 = vdwg.mxu0
        %1938 = vmax.xlane.f32.xlu0 %v1899
        %v1939 = vpop.xlane.xlu0 %1938
        %1940 = vmax.xlane.f32.xlu0 %v1901
        %v1941 = vpop.xlane.xlu0 %1940
        %1942 = vmax.xlane.f32.xlu0 %v1904
        %v1943 = vpop.xlane.xlu0 %1942
        %1944 = vmax.xlane.f32.xlu0 %v1906
        %v1945 = vpop.xlane.xlu0 %1944
        %1946 = vmax.xlane.f32.xlu0 %v1909
        %v1947 = vpop.xlane.xlu0 %1946
        %1948 = vmax.xlane.f32.xlu0 %v1911
        %v1949 = vpop.xlane.xlu0 %1948
        %1950 = vmax.xlane.f32.xlu0 %v1914
        %v1951 = vpop.xlane.xlu0 %1950
        %1952 = vmax.xlane.f32.xlu0 %v1916
        %v1953 = vpop.xlane.xlu0 %1952
        %1954 = vmax.xlane.f32.xlu0 %v1919
        %v1955 = vpop.xlane.xlu0 %1954
        %1956 = vmax.xlane.f32.xlu0 %v1921
        %v1957 = vpop.xlane.xlu0 %1956
        %1958 = vmax.xlane.f32.xlu0 %v1924
        %v1959 = vpop.xlane.xlu0 %1958
        %1960 = vmax.xlane.f32.xlu0 %v1926
        %v1961 = vpop.xlane.xlu0 %1960
        %1962 = vmax.xlane.f32.xlu0 %v1929
        %v1963 = vpop.xlane.xlu0 %1962
        %1964 = vmax.xlane.f32.xlu0 %v1931
        %v1965 = vpop.xlane.xlu0 %1964
        %1966 = vmax.xlane.f32.xlu0 %v1934
        %v1967 = vpop.xlane.xlu0 %1966
        %1968 = vmax.xlane.f32.xlu0 %v1936
        %v1969 = vpop.xlane.xlu0 %1968
        %v1970 = vsub.f32 %v1899, %v1939
        %v1971 = vsub.f32 %v1901, %v1941
        %v1972 = vsub.f32 %v1904, %v1943
        %v1973 = vsub.f32 %v1906, %v1945
        %v1974 = vsub.f32 %v1909, %v1947
        %v1975 = vsub.f32 %v1911, %v1949
        %v1976 = vsub.f32 %v1914, %v1951
        %v1977 = vsub.f32 %v1916, %v1953
        %v1978 = vsub.f32 %v1919, %v1955
        %v1979 = vsub.f32 %v1921, %v1957
        %v1980 = vsub.f32 %v1924, %v1959
        %v1981 = vsub.f32 %v1926, %v1961
        %v1982 = vsub.f32 %v1929, %v1963
        %v1983 = vsub.f32 %v1931, %v1965
        %v1984 = vsub.f32 %v1934, %v1967
        %v1985 = vsub.f32 %v1936, %v1969
        %v1986 = vmul.f32 %v1970, 1.442695
        %v1987 = vpow.pop %v1986
        %v1988 = vmul.f32 %v1971, 1.442695
        %v1989 = vpow.pop %v1988
        %v1990 = vmul.f32 %v1972, 1.442695
        %v1991 = vpow.pop %v1990
        %v1992 = vmul.f32 %v1973, 1.442695
        %v1993 = vpow.pop %v1992
        %v1994 = vmul.f32 %v1974, 1.442695
        %v1995 = vpow.pop %v1994
        %v1996 = vmul.f32 %v1975, 1.442695
        %v1997 = vpow.pop %v1996
        %v1998 = vmul.f32 %v1976, 1.442695
        %v1999 = vpow.pop %v1998
        %v2000 = vmul.f32 %v1977, 1.442695
        %v2001 = vpow.pop %v2000
        %v2002 = vmul.f32 %v1978, 1.442695
        %v2003 = vpow.pop %v2002
        %v2004 = vmul.f32 %v1979, 1.442695
        %v2005 = vpow.pop %v2004
        %v2006 = vmul.f32 %v1980, 1.442695
        %v2007 = vpow.pop %v2006
        %v2008 = vmul.f32 %v1981, 1.442695
        %v2009 = vpow.pop %v2008
        %v2010 = vmul.f32 %v1982, 1.442695
        %v2011 = vpow.pop %v2010
        %v2012 = vmul.f32 %v1983, 1.442695
        %v2013 = vpow.pop %v2012
        %v2014 = vmul.f32 %v1984, 1.442695
        %v2015 = vpow.pop %v2014
        %v2016 = vmul.f32 %v1985, 1.442695
        %v2017 = vpow.pop %v2016
        %2018 = vadd.xlane.f32.xlu0 %v1987
        %v2019 = vpop.xlane.xlu0 %2018
        %2020 = vadd.xlane.f32.xlu0 %v1989
        %v2021 = vpop.xlane.xlu0 %2020
        %2022 = vadd.xlane.f32.xlu0 %v1991
        %v2023 = vpop.xlane.xlu0 %2022
        %2024 = vadd.xlane.f32.xlu0 %v1993
        %v2025 = vpop.xlane.xlu0 %2024
        %2026 = vadd.xlane.f32.xlu0 %v1995
        %v2027 = vpop.xlane.xlu0 %2026
        %2028 = vadd.xlane.f32.xlu0 %v1997
        %v2029 = vpop.xlane.xlu0 %2028
        %2030 = vadd.xlane.f32.xlu0 %v1999
        %v2031 = vpop.xlane.xlu0 %2030
        %2032 = vadd.xlane.f32.xlu0 %v2001
        %v2033 = vpop.xlane.xlu0 %2032
        %2034 = vadd.xlane.f32.xlu0 %v2003
        %v2035 = vpop.xlane.xlu0 %2034
        %2036 = vadd.xlane.f32.xlu0 %v2005
        %v2037 = vpop.xlane.xlu0 %2036
        %2038 = vadd.xlane.f32.xlu0 %v2007
        %v2039 = vpop.xlane.xlu0 %2038
        %2040 = vadd.xlane.f32.xlu0 %v2009
        %v2041 = vpop.xlane.xlu0 %2040
        %2042 = vadd.xlane.f32.xlu0 %v2011
        %v2043 = vpop.xlane.xlu0 %2042
        %2044 = vadd.xlane.f32.xlu0 %v2013
        %v2045 = vpop.xlane.xlu0 %2044
        %2046 = vadd.xlane.f32.xlu0 %v2015
        %v2047 = vpop.xlane.xlu0 %2046
        %2048 = vadd.xlane.f32.xlu0 %v2017
        %v2049 = vpop.xlane.xlu0 %2048
        %v2050 = vrcp.pop %v2019
        %v2051 = vrcp.pop %v2021
        %v2052 = vrcp.pop %v2023
        %v2053 = vrcp.pop %v2025
        %v2054 = vrcp.pop %v2027
        %v2055 = vrcp.pop %v2029
        %v2056 = vrcp.pop %v2031
        %v2057 = vrcp.pop %v2033
        %v2058 = vrcp.pop %v2035
        %v2059 = vrcp.pop %v2037
        %v2060 = vrcp.pop %v2039
        %v2061 = vrcp.pop %v2041
        %v2062 = vrcp.pop %v2043
        %v2063 = vrcp.pop %v2045
        %v2064 = vrcp.pop %v2047
        %v2065 = vrcp.pop %v2049
        %v2066 = vmul.f32 %v1987, %v2050
        %v2067 = vmul.f32 %v1989, %v2051
        %v2068 = vmul.f32 %v1991, %v2052
        %v2069 = vmul.f32 %v1993, %v2053
        %v2070 = vmul.f32 %v1995, %v2054
        %v2071 = vmul.f32 %v1997, %v2055
        %v2072 = vmul.f32 %v1999, %v2056
        %v2073 = vmul.f32 %v2001, %v2057
        %v2074 = vmul.f32 %v2003, %v2058
        %v2075 = vmul.f32 %v2005, %v2059
        %v2076 = vmul.f32 %v2007, %v2060
        %v2077 = vmul.f32 %v2009, %v2061
        %v2078 = vmul.f32 %v2011, %v2062
        %v2079 = vmul.f32 %v2013, %v2063
        %v2080 = vmul.f32 %v2015, %v2064
        %v2081 = vmul.f32 %v2017, %v2065
        %v2082 = vpack.c.bf16 %v2066, %v2066
        %v2083 = vpack.c.bf16 %v2067, %v2067
        %v2084 = vpack.c.bf16 %v2068, %v2068
        %v2085 = vpack.c.bf16 %v2069, %v2069
        %v2086 = vpack.c.bf16 %v2070, %v2070
        %v2087 = vpack.c.bf16 %v2071, %v2071
        %v2088 = vpack.c.bf16 %v2072, %v2072
        %v2089 = vpack.c.bf16 %v2073, %v2073
        %v2090 = vpack.c.bf16 %v2074, %v2074
        %v2091 = vpack.c.bf16 %v2075, %v2075
        %v2092 = vpack.c.bf16 %v2076, %v2076
        %v2093 = vpack.c.bf16 %v2077, %v2077
        %v2094 = vpack.c.bf16 %v2078, %v2078
        %v2095 = vpack.c.bf16 %v2079, %v2079
        %v2096 = vpack.c.bf16 %v2080, %v2080
        %v2097 = vpack.c.bf16 %v2081, %v2081
        %v2114 = vunpack.c.l.b16 %v2082
        %v2115 = vunpack.c.l.b16 %v2083
        %v2116 = vunpack.c.l.b16 %v2084
        %v2117 = vunpack.c.l.b16 %v2085
        %v2118 = vunpack.c.l.b16 %v2086
        %v2119 = vunpack.c.l.b16 %v2087
        %v2120 = vunpack.c.l.b16 %v2088
        %v2121 = vunpack.c.l.b16 %v2089
        %v2122 = vunpack.c.l.b16 %v2090
        %v2123 = vunpack.c.l.b16 %v2091
        %v2124 = vunpack.c.l.b16 %v2092
        %v2125 = vunpack.c.l.b16 %v2093
        %v2126 = vunpack.c.l.b16 %v2094
        %v2127 = vunpack.c.l.b16 %v2095
        %v2128 = vunpack.c.l.b16 %v2096
        %v2129 = vunpack.c.l.b16 %v2097
        %v2130 = vpack.c.b16 %v2115, %v2114
        %v2131 = vpack.c.b16 %v2117, %v2116
        %v2132 = vpack.c.b16 %v2119, %v2118
        %v2133 = vpack.c.b16 %v2121, %v2120
        %v2134 = vpack.c.b16 %v2123, %v2122
        %v2135 = vpack.c.b16 %v2125, %v2124
        %v2136 = vpack.c.b16 %v2127, %v2126
        %v2137 = vpack.c.b16 %v2129, %v2128
        %2146 = vrot.lane.b32.xlu0 %v1092, 64
        %v2147 = vpop.permute.xlu0 %2146
        %2148 = vrot.lane.b32.xlu0 %v1093, 64
        %v2149 = vpop.permute.xlu0 %2148
        %2150 = vrot.lane.b32.xlu0 %v1094, 64
        %v2151 = vpop.permute.xlu0 %2150
        %2152 = vrot.lane.b32.xlu0 %v1095, 64
        %v2153 = vpop.permute.xlu0 %2152
        %2154 = vrot.lane.b32.xlu0 %v1096, 64
        %v2155 = vpop.permute.xlu0 %2154
        %2156 = vrot.lane.b32.xlu0 %v1097, 64
        %v2157 = vpop.permute.xlu0 %2156
        %2158 = vrot.lane.b32.xlu0 %v1098, 64
        %v2159 = vpop.permute.xlu0 %2158
        %2160 = vrot.lane.b32.xlu0 %v1099, 64
        %v2161 = vpop.permute.xlu0 %2160
        %2170 = vmatpush.bf16.msra.mxu0 %v2161
        %2171 = vmatpush.bf16.msra.mxu0 %v2159
        %2172 = vmatpush.bf16.msra.mxu0 %v2157
        %2173 = vmatpush.bf16.msra.mxu0 %v2155
        %2174 = vmatpush.bf16.msra.mxu0 %v2153
        %2175 = vmatpush.bf16.msra.mxu0 %v2151
        %2176 = vmatpush.bf16.msra.mxu0 %v2149
        %2177 = vmatpush.bf16.msra.mxu0 %v2147
        %2178 = vmatmul.bf16.gmra.mxu0 %v2130
        %v2179 = vpop.f32.mrf.mxu0
        %v2180 = vadd.f32 0.0, %v2179
        %v2181 = vpop.f32.mrf.mxu0
        %v2182 = vadd.f32 0.0, %v2181
        %2183 = vmatmul.bf16.gmra.mxu0 %v2131
        %v2184 = vpop.f32.mrf.mxu0
        %v2185 = vadd.f32 0.0, %v2184
        %v2186 = vpop.f32.mrf.mxu0
        %v2187 = vadd.f32 0.0, %v2186
        %2188 = vmatmul.bf16.gmra.mxu0 %v2132
        %v2189 = vpop.f32.mrf.mxu0
        %v2190 = vadd.f32 0.0, %v2189
        %v2191 = vpop.f32.mrf.mxu0
        %v2192 = vadd.f32 0.0, %v2191
        %2193 = vmatmul.bf16.gmra.mxu0 %v2133
        %v2194 = vpop.f32.mrf.mxu0
        %v2195 = vadd.f32 0.0, %v2194
        %v2196 = vpop.f32.mrf.mxu0
        %v2197 = vadd.f32 0.0, %v2196
        %2198 = vmatmul.bf16.gmra.mxu0 %v2134
        %v2199 = vpop.f32.mrf.mxu0
        %v2200 = vadd.f32 0.0, %v2199
        %v2201 = vpop.f32.mrf.mxu0
        %v2202 = vadd.f32 0.0, %v2201
        %2203 = vmatmul.bf16.gmra.mxu0 %v2135
        %v2204 = vpop.f32.mrf.mxu0
        %v2205 = vadd.f32 0.0, %v2204
        %v2206 = vpop.f32.mrf.mxu0
        %v2207 = vadd.f32 0.0, %v2206
        %2208 = vmatmul.bf16.gmra.mxu0 %v2136
        %v2209 = vpop.f32.mrf.mxu0
        %v2210 = vadd.f32 0.0, %v2209
        %v2211 = vpop.f32.mrf.mxu0
        %v2212 = vadd.f32 0.0, %v2211
        %2213 = vmatmul.bf16.gmra.mxu0 %v2137
        %v2214 = vpop.f32.mrf.mxu0
        %v2215 = vadd.f32 0.0, %v2214
        %v2216 = vpop.f32.mrf.mxu0
        %v2217 = vadd.f32 0.0, %v2216
        %2218 = vdwg.mxu0
        %v2219 = vpack.c.bf16 %v2180, %v2180
        %v2220 = vpack.c.bf16 %v2182, %v2182
        %v2221 = vpack.c.bf16 %v2185, %v2185
        %v2222 = vpack.c.bf16 %v2187, %v2187
        %v2223 = vpack.c.bf16 %v2190, %v2190
        %v2224 = vpack.c.bf16 %v2192, %v2192
        %v2225 = vpack.c.bf16 %v2195, %v2195
        %v2226 = vpack.c.bf16 %v2197, %v2197
        %v2227 = vpack.c.bf16 %v2200, %v2200
        %v2228 = vpack.c.bf16 %v2202, %v2202
        %v2229 = vpack.c.bf16 %v2205, %v2205
        %v2230 = vpack.c.bf16 %v2207, %v2207
        %v2231 = vpack.c.bf16 %v2210, %v2210
        %v2232 = vpack.c.bf16 %v2212, %v2212
        %v2233 = vpack.c.bf16 %v2215, %v2215
        %v2234 = vpack.c.bf16 %v2217, %v2217
        %2251 = vrot.lane.b32.xlu0 %v2219, 64
        %v2252 = vpop.permute.xlu0 %2251
        %2253 = vrot.lane.b32.xlu0 %v2220, 64
        %v2254 = vpop.permute.xlu0 %2253
        %2255 = vrot.lane.b32.xlu0 %v2221, 64
        %v2256 = vpop.permute.xlu0 %2255
        %2257 = vrot.lane.b32.xlu0 %v2222, 64
        %v2258 = vpop.permute.xlu0 %2257
        %2259 = vrot.lane.b32.xlu0 %v2223, 64
        %v2260 = vpop.permute.xlu0 %2259
        %2261 = vrot.lane.b32.xlu0 %v2224, 64
        %v2262 = vpop.permute.xlu0 %2261
        %2263 = vrot.lane.b32.xlu0 %v2225, 64
        %v2264 = vpop.permute.xlu0 %2263
        %2265 = vrot.lane.b32.xlu0 %v2226, 64
        %v2266 = vpop.permute.xlu0 %2265
        %2267 = vrot.lane.b32.xlu0 %v2227, 64
        %v2268 = vpop.permute.xlu0 %2267
        %2269 = vrot.lane.b32.xlu0 %v2228, 64
        %v2270 = vpop.permute.xlu0 %2269
        %2271 = vrot.lane.b32.xlu0 %v2229, 64
        %v2272 = vpop.permute.xlu0 %2271
        %2273 = vrot.lane.b32.xlu0 %v2230, 64
        %v2274 = vpop.permute.xlu0 %2273
        %2275 = vrot.lane.b32.xlu0 %v2231, 64
        %v2276 = vpop.permute.xlu0 %2275
        %2277 = vrot.lane.b32.xlu0 %v2232, 64
        %v2278 = vpop.permute.xlu0 %2277
        %2279 = vrot.lane.b32.xlu0 %v2233, 64
        %v2280 = vpop.permute.xlu0 %2279
        %2281 = vrot.lane.b32.xlu0 %v2234, 64
        %v2282 = vpop.permute.xlu0 %2281
        %vm2299 = vcmask 781824
        %2300 = vst.msk [vmem:[#allocation2] sm:$0xf] %vm2299, %v2252
        %2301 = vst.msk [vmem:[#allocation2 + $0x4] sm:$0xf] %vm2299, %v2254
        %2302 = vst.msk [vmem:[#allocation2 + $0x8] sm:$0xf] %vm2299, %v2256
        %2303 = vst.msk [vmem:[#allocation2 + $0xc] sm:$0xf] %vm2299, %v2258
        %2304 = vst.msk [vmem:[#allocation2 + $0x10] sm:$0xf] %vm2299, %v2260
        %2305 = vst.msk [vmem:[#allocation2 + $0x14] sm:$0xf] %vm2299, %v2262
        %2306 = vst.msk [vmem:[#allocation2 + $0x18] sm:$0xf] %vm2299, %v2264
        %2307 = vst.msk [vmem:[#allocation2 + $0x1c] sm:$0xf] %vm2299, %v2266
        %2308 = vst.msk [vmem:[#allocation2 + $0x20] sm:$0xf] %vm2299, %v2268
        %2309 = vst.msk [vmem:[#allocation2 + $0x24] sm:$0xf] %vm2299, %v2270
        %2310 = vst.msk [vmem:[#allocation2 + $0x28] sm:$0xf] %vm2299, %v2272
        %2311 = vst.msk [vmem:[#allocation2 + $0x2c] sm:$0xf] %vm2299, %v2274
        %2312 = vst.msk [vmem:[#allocation2 + $0x30] sm:$0xf] %vm2299, %v2276
        %2313 = vst.msk [vmem:[#allocation2 + $0x34] sm:$0xf] %vm2299, %v2278
        %2314 = vst.msk [vmem:[#allocation2 + $0x38] sm:$0xf] %vm2299, %v2280
        %2315 = vst.msk [vmem:[#allocation2 + $0x3c] sm:$0xf] %vm2299, %v2282
        %2316 = vrot.lane.b32.xlu0 %v626, 32
        %v2317 = vpop.permute.xlu0 %2316
        %2318 = vrot.lane.b32.xlu0 %v628, 32
        %v2319 = vpop.permute.xlu0 %2318
        %2320 = vrot.lane.b32.xlu0 %v630, 32
        %v2321 = vpop.permute.xlu0 %2320
        %2322 = vrot.lane.b32.xlu0 %v632, 32
        %v2323 = vpop.permute.xlu0 %2322
        %2324 = vrot.lane.b32.xlu0 %v634, 32
        %v2325 = vpop.permute.xlu0 %2324
        %2326 = vrot.lane.b32.xlu0 %v636, 32
        %v2327 = vpop.permute.xlu0 %2326
        %2328 = vrot.lane.b32.xlu0 %v638, 32
        %v2329 = vpop.permute.xlu0 %2328
        %2330 = vrot.lane.b32.xlu0 %v640, 32
        %v2331 = vpop.permute.xlu0 %2330
        %2332 = vrot.lane.b32.xlu0 %v642, 32
        %v2333 = vpop.permute.xlu0 %2332
        %2334 = vrot.lane.b32.xlu0 %v644, 32
        %v2335 = vpop.permute.xlu0 %2334
        %2336 = vrot.lane.b32.xlu0 %v646, 32
        %v2337 = vpop.permute.xlu0 %2336
        %2338 = vrot.lane.b32.xlu0 %v648, 32
        %v2339 = vpop.permute.xlu0 %2338
        %2340 = vrot.lane.b32.xlu0 %v650, 32
        %v2341 = vpop.permute.xlu0 %2340
        %2342 = vrot.lane.b32.xlu0 %v652, 32
        %v2343 = vpop.permute.xlu0 %2342
        %2344 = vrot.lane.b32.xlu0 %v654, 32
        %v2345 = vpop.permute.xlu0 %2344
        %2346 = vrot.lane.b32.xlu0 %v656, 32
        %v2347 = vpop.permute.xlu0 %2346
        %v2348 = vrot.slane %v2317, 4
        %v2349 = vrot.slane %v2319, 4
        %v2350 = vrot.slane %v2321, 4
        %v2351 = vrot.slane %v2323, 4
        %v2352 = vrot.slane %v2325, 4
        %v2353 = vrot.slane %v2327, 4
        %v2354 = vrot.slane %v2329, 4
        %v2355 = vrot.slane %v2331, 4
        %v2356 = vrot.slane %v2333, 4
        %v2357 = vrot.slane %v2335, 4
        %v2358 = vrot.slane %v2337, 4
        %v2359 = vrot.slane %v2339, 4
        %v2360 = vrot.slane %v2341, 4
        %v2361 = vrot.slane %v2343, 4
        %v2362 = vrot.slane %v2345, 4
        %v2363 = vrot.slane %v2347, 4
        %2364 = vrot.lane.b32.xlu0 %v722, 32
        %v2365 = vpop.permute.xlu0 %2364
        %2366 = vrot.lane.b32.xlu0 %v723, 32
        %v2367 = vpop.permute.xlu0 %2366
        %2368 = vrot.lane.b32.xlu0 %v724, 32
        %v2369 = vpop.permute.xlu0 %2368
        %2370 = vrot.lane.b32.xlu0 %v725, 32
        %v2371 = vpop.permute.xlu0 %2370
        %2372 = vrot.lane.b32.xlu0 %v726, 32
        %v2373 = vpop.permute.xlu0 %2372
        %2374 = vrot.lane.b32.xlu0 %v727, 32
        %v2375 = vpop.permute.xlu0 %2374
        %2376 = vrot.lane.b32.xlu0 %v728, 32
        %v2377 = vpop.permute.xlu0 %2376
        %2378 = vrot.lane.b32.xlu0 %v729, 32
        %v2379 = vpop.permute.xlu0 %2378
        %v2380 = vunpack.c.l.b16 %v2348
        %v2381 = vunpack.c.l.b16 %v2349
        %v2382 = vunpack.c.l.b16 %v2350
        %v2383 = vunpack.c.l.b16 %v2351
        %v2384 = vunpack.c.l.b16 %v2352
        %v2385 = vunpack.c.l.b16 %v2353
        %v2386 = vunpack.c.l.b16 %v2354
        %v2387 = vunpack.c.l.b16 %v2355
        %v2388 = vunpack.c.l.b16 %v2356
        %v2389 = vunpack.c.l.b16 %v2357
        %v2390 = vunpack.c.l.b16 %v2358
        %v2391 = vunpack.c.l.b16 %v2359
        %v2392 = vunpack.c.l.b16 %v2360
        %v2393 = vunpack.c.l.b16 %v2361
        %v2394 = vunpack.c.l.b16 %v2362
        %v2395 = vunpack.c.l.b16 %v2363
        %v2396 = vpack.c.b16 %v2381, %v2380
        %v2397 = vpack.c.b16 %v2383, %v2382
        %v2398 = vpack.c.b16 %v2385, %v2384
        %v2399 = vpack.c.b16 %v2387, %v2386
        %v2400 = vpack.c.b16 %v2389, %v2388
        %v2401 = vpack.c.b16 %v2391, %v2390
        %v2402 = vpack.c.b16 %v2393, %v2392
        %v2403 = vpack.c.b16 %v2395, %v2394
        %v2405 = vsel %vm754, %v2365, 0
        %v2408 = vsel %vm754, %v2367, 0
        %v2411 = vsel %vm754, %v2369, 0
        %v2414 = vsel %vm754, %v2371, 0
        %v2417 = vsel %vm754, %v2373, 0
        %v2420 = vsel %vm754, %v2375, 0
        %v2423 = vsel %vm754, %v2377, 0
        %v2426 = vsel %vm754, %v2379, 0
        %v2429 = vsel %vm754, %v2396, 0
        %v2432 = vsel %vm754, %v2397, 0
        %v2435 = vsel %vm754, %v2398, 0
        %v2438 = vsel %vm754, %v2399, 0
        %v2441 = vsel %vm754, %v2400, 0
        %v2444 = vsel %vm754, %v2401, 0
        %v2447 = vsel %vm754, %v2402, 0
        %v2450 = vsel %vm754, %v2403, 0
        %2452 = vmatpush.bf16.xpose.msra.mxu0 %v2450
        %2453 = vmatpush.bf16.xpose.msra.mxu0 %v2447
        %2454 = vmatpush.bf16.xpose.msra.mxu0 %v2444
        %2455 = vmatpush.bf16.xpose.msra.mxu0 %v2441
        %2456 = vmatpush.bf16.xpose.msra.mxu0 %v2438
        %2457 = vmatpush.bf16.xpose.msra.mxu0 %v2435
        %2458 = vmatpush.bf16.xpose.msra.mxu0 %v2432
        %2459 = vmatpush.bf16.xpose.msra.mxu0 %v2429
        %2460 = vmatmul.bf16.gmra.mxu0 %v2405
        %v2461 = vpop.f32.mrf.mxu0
        %v2462 = vadd.f32 %v658, %v2461
        %v2463 = vpop.f32.mrf.mxu0
        %v2464 = vadd.f32 %v659, %v2463
        %2465 = vmatmul.bf16.gmra.mxu0 %v2408
        %v2466 = vpop.f32.mrf.mxu0
        %v2467 = vadd.f32 %v660, %v2466
        %v2468 = vpop.f32.mrf.mxu0
        %v2469 = vadd.f32 %v661, %v2468
        %2470 = vmatmul.bf16.gmra.mxu0 %v2411
        %v2471 = vpop.f32.mrf.mxu0
        %v2472 = vadd.f32 %v662, %v2471
        %v2473 = vpop.f32.mrf.mxu0
        %v2474 = vadd.f32 %v663, %v2473
        %2475 = vmatmul.bf16.gmra.mxu0 %v2414
        %v2476 = vpop.f32.mrf.mxu0
        %v2477 = vadd.f32 %v664, %v2476
        %v2478 = vpop.f32.mrf.mxu0
        %v2479 = vadd.f32 %v665, %v2478
        %2480 = vmatmul.bf16.gmra.mxu0 %v2417
        %v2481 = vpop.f32.mrf.mxu0
        %v2482 = vadd.f32 %v666, %v2481
        %v2483 = vpop.f32.mrf.mxu0
        %v2484 = vadd.f32 %v667, %v2483
        %2485 = vmatmul.bf16.gmra.mxu0 %v2420
        %v2486 = vpop.f32.mrf.mxu0
        %v2487 = vadd.f32 %v668, %v2486
        %v2488 = vpop.f32.mrf.mxu0
        %v2489 = vadd.f32 %v669, %v2488
        %2490 = vmatmul.bf16.gmra.mxu0 %v2423
        %v2491 = vpop.f32.mrf.mxu0
        %v2492 = vadd.f32 %v670, %v2491
        %v2493 = vpop.f32.mrf.mxu0
        %v2494 = vadd.f32 %v671, %v2493
        %2495 = vmatmul.bf16.gmra.mxu0 %v2426
        %v2496 = vpop.f32.mrf.mxu0
        %v2497 = vadd.f32 %v672, %v2496
        %v2498 = vpop.f32.mrf.mxu0
        %v2499 = vadd.f32 %v673, %v2498
        %2500 = vdwg.mxu0
        %2501 = vmax.xlane.f32.xlu0 %v2462
        %v2502 = vpop.xlane.xlu0 %2501
        %2503 = vmax.xlane.f32.xlu0 %v2464
        %v2504 = vpop.xlane.xlu0 %2503
        %2505 = vmax.xlane.f32.xlu0 %v2467
        %v2506 = vpop.xlane.xlu0 %2505
        %2507 = vmax.xlane.f32.xlu0 %v2469
        %v2508 = vpop.xlane.xlu0 %2507
        %2509 = vmax.xlane.f32.xlu0 %v2472
        %v2510 = vpop.xlane.xlu0 %2509
        %2511 = vmax.xlane.f32.xlu0 %v2474
        %v2512 = vpop.xlane.xlu0 %2511
        %2513 = vmax.xlane.f32.xlu0 %v2477
        %v2514 = vpop.xlane.xlu0 %2513
        %2515 = vmax.xlane.f32.xlu0 %v2479
        %v2516 = vpop.xlane.xlu0 %2515
        %2517 = vmax.xlane.f32.xlu0 %v2482
        %v2518 = vpop.xlane.xlu0 %2517
        %2519 = vmax.xlane.f32.xlu0 %v2484
        %v2520 = vpop.xlane.xlu0 %2519
        %2521 = vmax.xlane.f32.xlu0 %v2487
        %v2522 = vpop.xlane.xlu0 %2521
        %2523 = vmax.xlane.f32.xlu0 %v2489
        %v2524 = vpop.xlane.xlu0 %2523
        %2525 = vmax.xlane.f32.xlu0 %v2492
        %v2526 = vpop.xlane.xlu0 %2525
        %2527 = vmax.xlane.f32.xlu0 %v2494
        %v2528 = vpop.xlane.xlu0 %2527
        %2529 = vmax.xlane.f32.xlu0 %v2497
        %v2530 = vpop.xlane.xlu0 %2529
        %2531 = vmax.xlane.f32.xlu0 %v2499
        %v2532 = vpop.xlane.xlu0 %2531
        %v2533 = vsub.f32 %v2462, %v2502
        %v2534 = vsub.f32 %v2464, %v2504
        %v2535 = vsub.f32 %v2467, %v2506
        %v2536 = vsub.f32 %v2469, %v2508
        %v2537 = vsub.f32 %v2472, %v2510
        %v2538 = vsub.f32 %v2474, %v2512
        %v2539 = vsub.f32 %v2477, %v2514
        %v2540 = vsub.f32 %v2479, %v2516
        %v2541 = vsub.f32 %v2482, %v2518
        %v2542 = vsub.f32 %v2484, %v2520
        %v2543 = vsub.f32 %v2487, %v2522
        %v2544 = vsub.f32 %v2489, %v2524
        %v2545 = vsub.f32 %v2492, %v2526
        %v2546 = vsub.f32 %v2494, %v2528
        %v2547 = vsub.f32 %v2497, %v2530
        %v2548 = vsub.f32 %v2499, %v2532
        %v2549 = vmul.f32 %v2533, 1.442695
        %v2550 = vpow.pop %v2549
        %v2551 = vmul.f32 %v2534, 1.442695
        %v2552 = vpow.pop %v2551
        %v2553 = vmul.f32 %v2535, 1.442695
        %v2554 = vpow.pop %v2553
        %v2555 = vmul.f32 %v2536, 1.442695
        %v2556 = vpow.pop %v2555
        %v2557 = vmul.f32 %v2537, 1.442695
        %v2558 = vpow.pop %v2557
        %v2559 = vmul.f32 %v2538, 1.442695
        %v2560 = vpow.pop %v2559
        %v2561 = vmul.f32 %v2539, 1.442695
        %v2562 = vpow.pop %v2561
        %v2563 = vmul.f32 %v2540, 1.442695
        %v2564 = vpow.pop %v2563
        %v2565 = vmul.f32 %v2541, 1.442695
        %v2566 = vpow.pop %v2565
        %v2567 = vmul.f32 %v2542, 1.442695
        %v2568 = vpow.pop %v2567
        %v2569 = vmul.f32 %v2543, 1.442695
        %v2570 = vpow.pop %v2569
        %v2571 = vmul.f32 %v2544, 1.442695
        %v2572 = vpow.pop %v2571
        %v2573 = vmul.f32 %v2545, 1.442695
        %v2574 = vpow.pop %v2573
        %v2575 = vmul.f32 %v2546, 1.442695
        %v2576 = vpow.pop %v2575
        %v2577 = vmul.f32 %v2547, 1.442695
        %v2578 = vpow.pop %v2577
        %v2579 = vmul.f32 %v2548, 1.442695
        %v2580 = vpow.pop %v2579
        %2581 = vadd.xlane.f32.xlu0 %v2550
        %v2582 = vpop.xlane.xlu0 %2581
        %2583 = vadd.xlane.f32.xlu0 %v2552
        %v2584 = vpop.xlane.xlu0 %2583
        %2585 = vadd.xlane.f32.xlu0 %v2554
        %v2586 = vpop.xlane.xlu0 %2585
        %2587 = vadd.xlane.f32.xlu0 %v2556
        %v2588 = vpop.xlane.xlu0 %2587
        %2589 = vadd.xlane.f32.xlu0 %v2558
        %v2590 = vpop.xlane.xlu0 %2589
        %2591 = vadd.xlane.f32.xlu0 %v2560
        %v2592 = vpop.xlane.xlu0 %2591
        %2593 = vadd.xlane.f32.xlu0 %v2562
        %v2594 = vpop.xlane.xlu0 %2593
        %2595 = vadd.xlane.f32.xlu0 %v2564
        %v2596 = vpop.xlane.xlu0 %2595
        %2597 = vadd.xlane.f32.xlu0 %v2566
        %v2598 = vpop.xlane.xlu0 %2597
        %2599 = vadd.xlane.f32.xlu0 %v2568
        %v2600 = vpop.xlane.xlu0 %2599
        %2601 = vadd.xlane.f32.xlu0 %v2570
        %v2602 = vpop.xlane.xlu0 %2601
        %2603 = vadd.xlane.f32.xlu0 %v2572
        %v2604 = vpop.xlane.xlu0 %2603
        %2605 = vadd.xlane.f32.xlu0 %v2574
        %v2606 = vpop.xlane.xlu0 %2605
        %2607 = vadd.xlane.f32.xlu0 %v2576
        %v2608 = vpop.xlane.xlu0 %2607
        %2609 = vadd.xlane.f32.xlu0 %v2578
        %v2610 = vpop.xlane.xlu0 %2609
        %2611 = vadd.xlane.f32.xlu0 %v2580
        %v2612 = vpop.xlane.xlu0 %2611
        %v2613 = vrcp.pop %v2582
        %v2614 = vrcp.pop %v2584
        %v2615 = vrcp.pop %v2586
        %v2616 = vrcp.pop %v2588
        %v2617 = vrcp.pop %v2590
        %v2618 = vrcp.pop %v2592
        %v2619 = vrcp.pop %v2594
        %v2620 = vrcp.pop %v2596
        %v2621 = vrcp.pop %v2598
        %v2622 = vrcp.pop %v2600
        %v2623 = vrcp.pop %v2602
        %v2624 = vrcp.pop %v2604
        %v2625 = vrcp.pop %v2606
        %v2626 = vrcp.pop %v2608
        %v2627 = vrcp.pop %v2610
        %v2628 = vrcp.pop %v2612
        %v2629 = vmul.f32 %v2550, %v2613
        %v2630 = vmul.f32 %v2552, %v2614
        %v2631 = vmul.f32 %v2554, %v2615
        %v2632 = vmul.f32 %v2556, %v2616
        %v2633 = vmul.f32 %v2558, %v2617
        %v2634 = vmul.f32 %v2560, %v2618
        %v2635 = vmul.f32 %v2562, %v2619
        %v2636 = vmul.f32 %v2564, %v2620
        %v2637 = vmul.f32 %v2566, %v2621
        %v2638 = vmul.f32 %v2568, %v2622
        %v2639 = vmul.f32 %v2570, %v2623
        %v2640 = vmul.f32 %v2572, %v2624
        %v2641 = vmul.f32 %v2574, %v2625
        %v2642 = vmul.f32 %v2576, %v2626
        %v2643 = vmul.f32 %v2578, %v2627
        %v2644 = vmul.f32 %v2580, %v2628
        %v2645 = vpack.c.bf16 %v2629, %v2629
        %v2646 = vpack.c.bf16 %v2630, %v2630
        %v2647 = vpack.c.bf16 %v2631, %v2631
        %v2648 = vpack.c.bf16 %v2632, %v2632
        %v2649 = vpack.c.bf16 %v2633, %v2633
        %v2650 = vpack.c.bf16 %v2634, %v2634
        %v2651 = vpack.c.bf16 %v2635, %v2635
        %v2652 = vpack.c.bf16 %v2636, %v2636
        %v2653 = vpack.c.bf16 %v2637, %v2637
        %v2654 = vpack.c.bf16 %v2638, %v2638
        %v2655 = vpack.c.bf16 %v2639, %v2639
        %v2656 = vpack.c.bf16 %v2640, %v2640
        %v2657 = vpack.c.bf16 %v2641, %v2641
        %v2658 = vpack.c.bf16 %v2642, %v2642
        %v2659 = vpack.c.bf16 %v2643, %v2643
        %v2660 = vpack.c.bf16 %v2644, %v2644
        %v2677 = vunpack.c.l.b16 %v2645
        %v2678 = vunpack.c.l.b16 %v2646
        %v2679 = vunpack.c.l.b16 %v2647
        %v2680 = vunpack.c.l.b16 %v2648
        %v2681 = vunpack.c.l.b16 %v2649
        %v2682 = vunpack.c.l.b16 %v2650
        %v2683 = vunpack.c.l.b16 %v2651
        %v2684 = vunpack.c.l.b16 %v2652
        %v2685 = vunpack.c.l.b16 %v2653
        %v2686 = vunpack.c.l.b16 %v2654
        %v2687 = vunpack.c.l.b16 %v2655
        %v2688 = vunpack.c.l.b16 %v2656
        %v2689 = vunpack.c.l.b16 %v2657
        %v2690 = vunpack.c.l.b16 %v2658
        %v2691 = vunpack.c.l.b16 %v2659
        %v2692 = vunpack.c.l.b16 %v2660
        %v2693 = vpack.c.b16 %v2678, %v2677
        %v2694 = vpack.c.b16 %v2680, %v2679
        %v2695 = vpack.c.b16 %v2682, %v2681
        %v2696 = vpack.c.b16 %v2684, %v2683
        %v2697 = vpack.c.b16 %v2686, %v2685
        %v2698 = vpack.c.b16 %v2688, %v2687
        %v2699 = vpack.c.b16 %v2690, %v2689
        %v2700 = vpack.c.b16 %v2692, %v2691
        %2709 = vrot.lane.b32.xlu0 %v1092, 32
        %v2710 = vpop.permute.xlu0 %2709
        %2711 = vrot.lane.b32.xlu0 %v1093, 32
        %v2712 = vpop.permute.xlu0 %2711
        %2713 = vrot.lane.b32.xlu0 %v1094, 32
        %v2714 = vpop.permute.xlu0 %2713
        %2715 = vrot.lane.b32.xlu0 %v1095, 32
        %v2716 = vpop.permute.xlu0 %2715
        %2717 = vrot.lane.b32.xlu0 %v1096, 32
        %v2718 = vpop.permute.xlu0 %2717
        %2719 = vrot.lane.b32.xlu0 %v1097, 32
        %v2720 = vpop.permute.xlu0 %2719
        %2721 = vrot.lane.b32.xlu0 %v1098, 32
        %v2722 = vpop.permute.xlu0 %2721
        %2723 = vrot.lane.b32.xlu0 %v1099, 32
        %v2724 = vpop.permute.xlu0 %2723
        %2733 = vmatpush.bf16.msra.mxu0 %v2724
        %2734 = vmatpush.bf16.msra.mxu0 %v2722
        %2735 = vmatpush.bf16.msra.mxu0 %v2720
        %2736 = vmatpush.bf16.msra.mxu0 %v2718
        %2737 = vmatpush.bf16.msra.mxu0 %v2716
        %2738 = vmatpush.bf16.msra.mxu0 %v2714
        %2739 = vmatpush.bf16.msra.mxu0 %v2712
        %2740 = vmatpush.bf16.msra.mxu0 %v2710
        %2741 = vmatmul.bf16.gmra.mxu0 %v2693
        %v2742 = vpop.f32.mrf.mxu0
        %v2743 = vadd.f32 0.0, %v2742
        %v2744 = vpop.f32.mrf.mxu0
        %v2745 = vadd.f32 0.0, %v2744
        %2746 = vmatmul.bf16.gmra.mxu0 %v2694
        %v2747 = vpop.f32.mrf.mxu0
        %v2748 = vadd.f32 0.0, %v2747
        %v2749 = vpop.f32.mrf.mxu0
        %v2750 = vadd.f32 0.0, %v2749
        %2751 = vmatmul.bf16.gmra.mxu0 %v2695
        %v2752 = vpop.f32.mrf.mxu0
        %v2753 = vadd.f32 0.0, %v2752
        %v2754 = vpop.f32.mrf.mxu0
        %v2755 = vadd.f32 0.0, %v2754
        %2756 = vmatmul.bf16.gmra.mxu0 %v2696
        %v2757 = vpop.f32.mrf.mxu0
        %v2758 = vadd.f32 0.0, %v2757
        %v2759 = vpop.f32.mrf.mxu0
        %v2760 = vadd.f32 0.0, %v2759
        %2761 = vmatmul.bf16.gmra.mxu0 %v2697
        %v2762 = vpop.f32.mrf.mxu0
        %v2763 = vadd.f32 0.0, %v2762
        %v2764 = vpop.f32.mrf.mxu0
        %v2765 = vadd.f32 0.0, %v2764
        %2766 = vmatmul.bf16.gmra.mxu0 %v2698
        %v2767 = vpop.f32.mrf.mxu0
        %v2768 = vadd.f32 0.0, %v2767
        %v2769 = vpop.f32.mrf.mxu0
        %v2770 = vadd.f32 0.0, %v2769
        %2771 = vmatmul.bf16.gmra.mxu0 %v2699
        %v2772 = vpop.f32.mrf.mxu0
        %v2773 = vadd.f32 0.0, %v2772
        %v2774 = vpop.f32.mrf.mxu0
        %v2775 = vadd.f32 0.0, %v2774
        %2776 = vmatmul.bf16.gmra.mxu0 %v2700
        %v2777 = vpop.f32.mrf.mxu0
        %v2778 = vadd.f32 0.0, %v2777
        %v2779 = vpop.f32.mrf.mxu0
        %v2780 = vadd.f32 0.0, %v2779
        %2781 = vdwg.mxu0
        %v2782 = vpack.c.bf16 %v2743, %v2743
        %v2783 = vpack.c.bf16 %v2745, %v2745
        %v2784 = vpack.c.bf16 %v2748, %v2748
        %v2785 = vpack.c.bf16 %v2750, %v2750
        %v2786 = vpack.c.bf16 %v2753, %v2753
        %v2787 = vpack.c.bf16 %v2755, %v2755
        %v2788 = vpack.c.bf16 %v2758, %v2758
        %v2789 = vpack.c.bf16 %v2760, %v2760
        %v2790 = vpack.c.bf16 %v2763, %v2763
        %v2791 = vpack.c.bf16 %v2765, %v2765
        %v2792 = vpack.c.bf16 %v2768, %v2768
        %v2793 = vpack.c.bf16 %v2770, %v2770
        %v2794 = vpack.c.bf16 %v2773, %v2773
        %v2795 = vpack.c.bf16 %v2775, %v2775
        %v2796 = vpack.c.bf16 %v2778, %v2778
        %v2797 = vpack.c.bf16 %v2780, %v2780
        %2814 = vrot.lane.b32.xlu0 %v2782, 96
        %v2815 = vpop.permute.xlu0 %2814
        %2816 = vrot.lane.b32.xlu0 %v2783, 96
        %v2817 = vpop.permute.xlu0 %2816
        %2818 = vrot.lane.b32.xlu0 %v2784, 96
        %v2819 = vpop.permute.xlu0 %2818
        %2820 = vrot.lane.b32.xlu0 %v2785, 96
        %v2821 = vpop.permute.xlu0 %2820
        %2822 = vrot.lane.b32.xlu0 %v2786, 96
        %v2823 = vpop.permute.xlu0 %2822
        %2824 = vrot.lane.b32.xlu0 %v2787, 96
        %v2825 = vpop.permute.xlu0 %2824
        %2826 = vrot.lane.b32.xlu0 %v2788, 96
        %v2827 = vpop.permute.xlu0 %2826
        %2828 = vrot.lane.b32.xlu0 %v2789, 96
        %v2829 = vpop.permute.xlu0 %2828
        %2830 = vrot.lane.b32.xlu0 %v2790, 96
        %v2831 = vpop.permute.xlu0 %2830
        %2832 = vrot.lane.b32.xlu0 %v2791, 96
        %v2833 = vpop.permute.xlu0 %2832
        %2834 = vrot.lane.b32.xlu0 %v2792, 96
        %v2835 = vpop.permute.xlu0 %2834
        %2836 = vrot.lane.b32.xlu0 %v2793, 96
        %v2837 = vpop.permute.xlu0 %2836
        %2838 = vrot.lane.b32.xlu0 %v2794, 96
        %v2839 = vpop.permute.xlu0 %2838
        %2840 = vrot.lane.b32.xlu0 %v2795, 96
        %v2841 = vpop.permute.xlu0 %2840
        %2842 = vrot.lane.b32.xlu0 %v2796, 96
        %v2843 = vpop.permute.xlu0 %2842
        %2844 = vrot.lane.b32.xlu0 %v2797, 96
        %v2845 = vpop.permute.xlu0 %2844
        %vm2862 = vcmask 1044224
        %2863 = vst.msk [vmem:[#allocation2] sm:$0xf] %vm2862, %v2815
        %2864 = vst.msk [vmem:[#allocation2 + $0x4] sm:$0xf] %vm2862, %v2817
        %2865 = vst.msk [vmem:[#allocation2 + $0x8] sm:$0xf] %vm2862, %v2819
        %2866 = vst.msk [vmem:[#allocation2 + $0xc] sm:$0xf] %vm2862, %v2821
        %2867 = vst.msk [vmem:[#allocation2 + $0x10] sm:$0xf] %vm2862, %v2823
        %2868 = vst.msk [vmem:[#allocation2 + $0x14] sm:$0xf] %vm2862, %v2825
        %2869 = vst.msk [vmem:[#allocation2 + $0x18] sm:$0xf] %vm2862, %v2827
        %2870 = vst.msk [vmem:[#allocation2 + $0x1c] sm:$0xf] %vm2862, %v2829
        %2871 = vst.msk [vmem:[#allocation2 + $0x20] sm:$0xf] %vm2862, %v2831
        %2872 = vst.msk [vmem:[#allocation2 + $0x24] sm:$0xf] %vm2862, %v2833
        %2873 = vst.msk [vmem:[#allocation2 + $0x28] sm:$0xf] %vm2862, %v2835
        %2874 = vst.msk [vmem:[#allocation2 + $0x2c] sm:$0xf] %vm2862, %v2837
        %2875 = vst.msk [vmem:[#allocation2 + $0x30] sm:$0xf] %vm2862, %v2839
        %2876 = vst.msk [vmem:[#allocation2 + $0x34] sm:$0xf] %vm2862, %v2841
        %2877 = vst.msk [vmem:[#allocation2 + $0x38] sm:$0xf] %vm2862, %v2843
        %2878 = vst.msk [vmem:[#allocation2 + $0x3c] sm:$0xf] %vm2862, %v2845
        %v2879 = vld [vmem:[#allocation2] sm:$0xf]
        %v2880 = vld [vmem:[#allocation2 + $0x4] sm:$0xf]
        %v2881 = vld [vmem:[#allocation2 + $0x8] sm:$0xf]
        %v2882 = vld [vmem:[#allocation2 + $0xc] sm:$0xf]
        %v2883 = vld [vmem:[#allocation2 + $0x10] sm:$0xf]
        %v2884 = vld [vmem:[#allocation2 + $0x14] sm:$0xf]
        %v2885 = vld [vmem:[#allocation2 + $0x18] sm:$0xf]
        %v2886 = vld [vmem:[#allocation2 + $0x1c] sm:$0xf]
        %v2887 = vld [vmem:[#allocation2 + $0x20] sm:$0xf]
        %v2888 = vld [vmem:[#allocation2 + $0x24] sm:$0xf]
        %v2889 = vld [vmem:[#allocation2 + $0x28] sm:$0xf]
        %v2890 = vld [vmem:[#allocation2 + $0x2c] sm:$0xf]
        %v2891 = vld [vmem:[#allocation2 + $0x30] sm:$0xf]
        %v2892 = vld [vmem:[#allocation2 + $0x34] sm:$0xf]
        %v2893 = vld [vmem:[#allocation2 + $0x38] sm:$0xf]
        %v2894 = vld [vmem:[#allocation2 + $0x3c] sm:$0xf]
        %v2895 = vld [vmem:[#allocation8] sm:$0xf]
        %v2896 = vld [vmem:[#allocation8 + $0x4] sm:$0xf]
        %v2897 = vld [vmem:[#allocation8 + $0x8] sm:$0xf]
        %v2898 = vld [vmem:[#allocation8 + $0xc] sm:$0xf]
        %v2899 = vld [vmem:[#allocation8 + $0x10] sm:$0xf]
        %v2900 = vld [vmem:[#allocation8 + $0x14] sm:$0xf]
        %v2901 = vld [vmem:[#allocation8 + $0x18] sm:$0xf]
        %v2902 = vld [vmem:[#allocation8 + $0x1c] sm:$0xf]
        %v2903 = vld [vmem:[#allocation8 + $0x20] sm:$0xf]
        %v2904 = vld [vmem:[#allocation8 + $0x24] sm:$0xf]
        %v2905 = vld [vmem:[#allocation8 + $0x28] sm:$0xf]
        %v2906 = vld [vmem:[#allocation8 + $0x2c] sm:$0xf]
        %v2907 = vld [vmem:[#allocation8 + $0x30] sm:$0xf]
        %v2908 = vld [vmem:[#allocation8 + $0x34] sm:$0xf]
        %v2909 = vld [vmem:[#allocation8 + $0x38] sm:$0xf]
        %v2910 = vld [vmem:[#allocation8 + $0x3c] sm:$0xf]
        %v2911 = vld [vmem:[%s3] sm:$0x1]
        %v2913 = vperm.slane %v2911, 0
        %v2931 = vunpack.c.l.b16 %v2879
        %v2932 = vunpack.c.l.b16 %v2880
        %v2933 = vunpack.c.l.b16 %v2881
        %v2934 = vunpack.c.l.b16 %v2882
        %v2935 = vunpack.c.l.b16 %v2883
        %v2936 = vunpack.c.l.b16 %v2884
        %v2937 = vunpack.c.l.b16 %v2885
        %v2938 = vunpack.c.l.b16 %v2886
        %v2939 = vunpack.c.l.b16 %v2887
        %v2940 = vunpack.c.l.b16 %v2888
        %v2941 = vunpack.c.l.b16 %v2889
        %v2942 = vunpack.c.l.b16 %v2890
        %v2943 = vunpack.c.l.b16 %v2891
        %v2944 = vunpack.c.l.b16 %v2892
        %v2945 = vunpack.c.l.b16 %v2893
        %v2946 = vunpack.c.l.b16 %v2894
        %v2947 = vpack.c.b16 %v2932, %v2931
        %v2948 = vpack.c.b16 %v2934, %v2933
        %v2949 = vpack.c.b16 %v2936, %v2935
        %v2950 = vpack.c.b16 %v2938, %v2937
        %v2951 = vpack.c.b16 %v2940, %v2939
        %v2952 = vpack.c.b16 %v2942, %v2941
        %v2953 = vpack.c.b16 %v2944, %v2943
        %v2954 = vpack.c.b16 %v2946, %v2945
        %v2979 = vunpack.c.l.b16 %v2895
        %v2980 = vunpack.c.l.b16 %v2896
        %v2981 = vunpack.c.l.b16 %v2897
        %v2982 = vunpack.c.l.b16 %v2898
        %v2983 = vunpack.c.l.b16 %v2899
        %v2984 = vunpack.c.l.b16 %v2900
        %v2985 = vunpack.c.l.b16 %v2901
        %v2986 = vunpack.c.l.b16 %v2902
        %v2987 = vunpack.c.l.b16 %v2903
        %v2988 = vunpack.c.l.b16 %v2904
        %v2989 = vunpack.c.l.b16 %v2905
        %v2990 = vunpack.c.l.b16 %v2906
        %v2991 = vunpack.c.l.b16 %v2907
        %v2992 = vunpack.c.l.b16 %v2908
        %v2993 = vunpack.c.l.b16 %v2909
        %v2994 = vunpack.c.l.b16 %v2910
        %v2995 = vpack.c.b16 %v2980, %v2979
        %v2996 = vpack.c.b16 %v2982, %v2981
        %v2997 = vpack.c.b16 %v2984, %v2983
        %v2998 = vpack.c.b16 %v2986, %v2985
        %v2999 = vpack.c.b16 %v2988, %v2987
        %v3000 = vpack.c.b16 %v2990, %v2989
        %v3001 = vpack.c.b16 %v2992, %v2991
        %v3002 = vpack.c.b16 %v2994, %v2993
        %3011 = vmatpush.bf16.msra.mxu0 %v3002
        %3012 = vmatpush.bf16.msra.mxu0 %v3001
        %3013 = vmatpush.bf16.msra.mxu0 %v3000
        %3014 = vmatpush.bf16.msra.mxu0 %v2999
        %3015 = vmatpush.bf16.msra.mxu0 %v2998
        %3016 = vmatpush.bf16.msra.mxu0 %v2997
        %3017 = vmatpush.bf16.msra.mxu0 %v2996
        %3018 = vmatpush.bf16.msra.mxu0 %v2995
        %3019 = vmatmul.bf16.gmra.mxu0 %v2947
        %v3020 = vpop.f32.mrf.mxu0
        %v3021 = vadd.f32 %v2913, %v3020
        %v3022 = vpop.f32.mrf.mxu0
        %v3023 = vadd.f32 %v2913, %v3022
        %3024 = vmatmul.bf16.gmra.mxu0 %v2948
        %v3025 = vpop.f32.mrf.mxu0
        %v3026 = vadd.f32 %v2913, %v3025
        %v3027 = vpop.f32.mrf.mxu0
        %v3028 = vadd.f32 %v2913, %v3027
        %3029 = vmatmul.bf16.gmra.mxu0 %v2949
        %v3030 = vpop.f32.mrf.mxu0
        %v3031 = vadd.f32 %v2913, %v3030
        %v3032 = vpop.f32.mrf.mxu0
        %v3033 = vadd.f32 %v2913, %v3032
        %3034 = vmatmul.bf16.gmra.mxu0 %v2950
        %v3035 = vpop.f32.mrf.mxu0
        %v3036 = vadd.f32 %v2913, %v3035
        %v3037 = vpop.f32.mrf.mxu0
        %v3038 = vadd.f32 %v2913, %v3037
        %3039 = vmatmul.bf16.gmra.mxu0 %v2951
        %v3040 = vpop.f32.mrf.mxu0
        %v3041 = vadd.f32 %v2913, %v3040
        %v3042 = vpop.f32.mrf.mxu0
        %v3043 = vadd.f32 %v2913, %v3042
        %3044 = vmatmul.bf16.gmra.mxu0 %v2952
        %v3045 = vpop.f32.mrf.mxu0
        %v3046 = vadd.f32 %v2913, %v3045
        %v3047 = vpop.f32.mrf.mxu0
        %v3048 = vadd.f32 %v2913, %v3047
        %3049 = vmatmul.bf16.gmra.mxu0 %v2953
        %v3050 = vpop.f32.mrf.mxu0
        %v3051 = vadd.f32 %v2913, %v3050
        %v3052 = vpop.f32.mrf.mxu0
        %v3053 = vadd.f32 %v2913, %v3052
        %3054 = vmatmul.bf16.gmra.mxu0 %v2954
        %v3055 = vpop.f32.mrf.mxu0
        %v3056 = vadd.f32 %v2913, %v3055
        %v3057 = vpop.f32.mrf.mxu0
        %v3058 = vadd.f32 %v2913, %v3057
        %3059 = vdwg.mxu0
        %3060 = vst [vmem:[%s294] sm:$0xff] %v3021
        %3061 = vst [vmem:[%s294 + $0x8] sm:$0xff] %v3023
        %3062 = vst [vmem:[%s294 + $0x10] sm:$0xff] %v3026
        %3063 = vst [vmem:[%s294 + $0x18] sm:$0xff] %v3028
        %3064 = vst [vmem:[%s294 + $0x20] sm:$0xff] %v3031
        %3065 = vst [vmem:[%s294 + $0x28] sm:$0xff] %v3033
        %3066 = vst [vmem:[%s294 + $0x30] sm:$0xff] %v3036
        %3067 = vst [vmem:[%s294 + $0x38] sm:$0xff] %v3038
        %3068 = vst [vmem:[%s294 + $0x40] sm:$0xff] %v3041
        %3069 = vst [vmem:[%s294 + $0x48] sm:$0xff] %v3043
        %3070 = vst [vmem:[%s294 + $0x50] sm:$0xff] %v3046
        %3071 = vst [vmem:[%s294 + $0x58] sm:$0xff] %v3048
        %3072 = vst [vmem:[%s294 + $0x60] sm:$0xff] %v3051
        %3073 = vst [vmem:[%s294 + $0x68] sm:$0xff] %v3053
        %3074 = vst [vmem:[%s294 + $0x70] sm:$0xff] %v3056
        %3075 = vst [vmem:[%s294 + $0x78] sm:$0xff] %v3058
        %s3076 = sand.u32 %s142, 1
        %s3077 = scalar_lea.sflag [#allocation5], %s3076
        %s3078 = sand.u32 %s142, 1
        %s3079 = smul.addr %s3078, 128
        %s3080 = scalar_lea.vmem [#allocation11], %s3079
        // Predicated region
        $region57: #{tpu_custom_call.1} parent=39 // pred_check
          %p3081 = pneg %p152
        $region58: #{tpu_custom_call.1} parent=39 // pred_check_branch
          %3083 = sbr.rel (%p3081) target = $region60
        $region59: #{tpu_custom_call.1} parent=39 // pred_region
          %3085 = vsyncadd %s3077, 0
          %s3086 = smul.addr %s24, 16
          %s3087 = smul.addr %s3086, 8
          %s3088 = scalar_lea.hbm %s5, %s3087
          %s3089 = sshll.u32 %s3080, 4
          %s3090 = int_to_ptr.vmem [resolvable:$true] %s3089
          %s3091 = sshll.u32 %s3088, 4
          %s3092 = int_to_ptr.hbm [resolvable:$true] %s3091
          %3097 = dma.vmem_to_hbm [thread:$0]  %s3090, 2048, %s3092, %s3077, 128, 128, 8
        $region60: #{tpu_custom_call.1} parent=39 // pred_fallthru
          _
      $region40: #{tpu_custom_call.1} parent=5 // pred_fallthru
        _
      %p3098 = scmp.le.s32.totalorder 2, %s19
      // Predicated region
      $region61: #{tpu_custom_call.1} parent=5 // pred_check
        %p3099 = pneg %p3098
      $region62: #{tpu_custom_call.1} parent=5 // pred_check_branch
        %3101 = sbr.rel (%p3099) target = $region64
      $region63: #{tpu_custom_call.1} parent=5 // pred_region
        %s3102 = ssub.s32 %s19, 2
        // Predicated region
        $region65: #{tpu_custom_call.1} parent=63 // pred_check
          %p3103 = pneg %p158
        $region66: #{tpu_custom_call.1} parent=63 // pred_check_branch
          %3105 = sbr.rel (%p3103) target = $region68
        $region67: #{tpu_custom_call.1} parent=63 // pred_region
          %s3106 = sand.u32 %s143, 1
          %s3107 = scalar_lea.sflag [#allocation5], %s3106
          %s3108 = sand.u32 %s143, 1
          %s3109 = smul.addr %s3108, 128
          %s3110 = scalar_lea.vmem [#allocation11], %s3109
          %3112 = dma.done %s3107, 2048
        $region68: #{tpu_custom_call.1} parent=63 // pred_fallthru
          _
      $region64: #{tpu_custom_call.1} parent=5 // pred_fallthru
        _
    $region6: #{tpu_custom_call.1} parent=1 // loop_footer
      %s23 = sadd.s32 1, %s19
    $region7: #{tpu_custom_call.1} parent=1 // loop_footer_branch
      %18 = sbr.rel target = $region3
    $region8: #{tpu_custom_call.1} parent=1 // loop_exit
      _
    %3113 = vsyncpa [#allocation4], 1
    %s3114 = scalar_lea.sflag [#allocation4], 1
    %3115 = vsyncpa %s3114, 1
    %3116 = vsyncpa [#allocation7], 1
    %3117 = vsyncpa [#allocation10], 1
    %3118 = vsyncpa [#allocation5], 1
    %s3119 = scalar_lea.sflag [#allocation5], 1
    %3120 = vsyncpa %s3119, 1

</llo_original>
